<compile_context>
chip_gen: v6e
topology: v6e:2x2x1
jax: 0.10.0
libtpu: 0.0.40
codegen_flags: <defaults>
</compile_context>

<pallas_src>
import functools

import jax
import jax.numpy as jnp
from jax import lax
from jax.experimental import pallas as pl
from jax.experimental.pallas import tpu as pltpu


NEG_BIG = -1e30                      # finite "-inf" (Python float -> literal)
LN_EPS = 1e-5                        # torch nn.LayerNorm default
VMEM_LIMIT = 48 * 1024 * 1024        # explicit scoped-VMEM budget (< v7x 64 MiB physical)


# --------------------------------------------------------------------------
# Fused MHA kernel: Q/K(V) projection + masked softmax attention + fc
#                   + residual + LayerNorm + non-pad mask
# --------------------------------------------------------------------------

def _mha_kernel(xq_ref, xkv_ref, mask_ref, npm_ref,
                wq_ref, bq_ref, wk_ref, bk_ref, wfc_ref, bfc_ref,
                g_ref, beta_ref, out_ref, attn_ref, *, n_heads, dk, dv):
    f32 = jnp.float32
    bf16 = jnp.bfloat16

    tq = xq_ref.shape[1]
    lk = xkv_ref.shape[1]

    xq_f32 = xq_ref[0].astype(f32)                 # (tq, D)  residual / LN in f32
    xq_bf = xq_ref[0].astype(bf16)
    xkv_bf = xkv_ref[0].astype(bf16)               # (Lk, D)

    # Projections (MXU, f32 accumulation). 1/8 temperature folded into q.
    q_proj = jnp.dot(xq_bf, wq_ref[...], preferred_element_type=f32) + bq_ref[...]
    q_proj = q_proj * 0.125
    kv_proj = jnp.dot(xkv_bf, wk_ref[...], preferred_element_type=f32) + bk_ref[...]
    # NOTE: when Lq is tiled the K/V projection is recomputed per q-tile
    # (trade-off for keeping the kernel single-pass and both grid axes parallel).

    # Batched per-head attention — no per-head python loop / lane concat.
    qh = jnp.transpose(q_proj.reshape(tq, n_heads, dk), (1, 0, 2)).astype(bf16)   # (H,tq,dk)
    kh = jnp.transpose(kv_proj.reshape(lk, n_heads, dk), (1, 0, 2)).astype(bf16)  # (H,Lk,dk)

    s = lax.dot_general(qh, kh, (((2,), (2,)), ((0,), (0,))),
                        preferred_element_type=f32)                               # (H,tq,Lk)
    neg = mask_ref[0].astype(f32) * NEG_BIG                                        # (tq,Lk)
    s = s + neg[None, :, :]

    m = jnp.max(s, axis=-1, keepdims=True)
    e = jnp.exp(s - m)
    l = jnp.sum(e, axis=-1, keepdims=True)
    p = e / l                                                                      # (H,tq,Lk)
    attn_ref[:, 0] = p.astype(attn_ref.dtype)       # bf16 writeback
    # TODO(synk): attention dropout skipped (identity at inference).

    # reference: v = w_ks(v) with v == k input  ->  V projection == K projection
    ctx = lax.dot_general(p.astype(bf16), kh, (((2,), (1,)), ((0,), (0,))),
                          preferred_element_type=f32)                              # (H,tq,dv)
    ctx = jnp.transpose(ctx, (1, 0, 2)).reshape(tq, n_heads * dv)

    # fc + residual + LayerNorm + non-pad mask, all fused (no HBM round trips)
    y = jnp.dot(ctx.astype(bf16), wfc_ref[...], preferred_element_type=f32) + bfc_ref[...]
    # TODO(synk): output dropout skipped (identity at inference).
    y = y + xq_f32
    mu = jnp.mean(y, axis=-1, keepdims=True)
    var = jnp.mean((y - mu) ** 2, axis=-1, keepdims=True)     # biased, as torch LN
    y = (y - mu) * lax.rsqrt(var + LN_EPS) * g_ref[...] + beta_ref[...]
    out_ref[0] = (y * npm_ref[0]).astype(out_ref.dtype)


def pallas_mha(q_in, kv_in, mask, non_pad_mask, p, n_heads, dk, dv,
               out_dtype=jnp.bfloat16):
    """q_in: (B, Lq, D); kv_in: (B, Lk, D); mask: (B, Lq, Lk) bool; npm: (B, Lq, 1)."""
    B, Lq, D = q_in.shape
    Lk = kv_in.shape[1]
    hdk = n_heads * dk
    hdv = n_heads * dv
    assert dk == dv, "reference projects V with w_ks -> requires dk == dv"

    # Lq tile keeps per-step VMEM bounded (mask + bf16 attn blocks scale with tq).
    if Lq % 256 == 0:
        tq = 256
    elif Lq % 128 == 0:
        tq = 128
    else:
        tq = Lq

    mask_i8 = mask.astype(jnp.int8)      # 4x smaller HBM read than f32
    kern = functools.partial(_mha_kernel, n_heads=n_heads, dk=dk, dv=dv)

    out, attn = pl.pallas_call(
        kern,
        out_shape=(jax.ShapeDtypeStruct((B, Lq, D), out_dtype),
                   jax.ShapeDtypeStruct((n_heads, B, Lq, Lk), jnp.bfloat16)),
        grid=(B, Lq // tq),
        in_specs=[
            pl.BlockSpec((1, tq, D), lambda b, i: (b, i, 0)),      # q rows (tiled)
            pl.BlockSpec((1, Lk, D), lambda b, i: (b, 0, 0)),      # full k/v source
            pl.BlockSpec((1, tq, Lk), lambda b, i: (b, i, 0)),     # int8 mask tile
            pl.BlockSpec((1, tq, 1), lambda b, i: (b, i, 0)),      # non-pad mask
            pl.BlockSpec((D, hdk), lambda b, i: (0, 0)),           # w_qs (bf16)
            pl.BlockSpec((1, hdk), lambda b, i: (0, 0)),           # b_qs
            pl.BlockSpec((D, hdk), lambda b, i: (0, 0)),           # w_ks (bf16)
            pl.BlockSpec((1, hdk), lambda b, i: (0, 0)),           # b_ks
            pl.BlockSpec((hdv, D), lambda b, i: (0, 0)),           # w_fc (bf16)
            pl.BlockSpec((1, D), lambda b, i: (0, 0)),             # b_fc
            pl.BlockSpec((1, D), lambda b, i: (0, 0)),             # ln gamma
            pl.BlockSpec((1, D), lambda b, i: (0, 0)),             # ln beta
        ],
        out_specs=(
            pl.BlockSpec((1, tq, D), lambda b, i: (b, i, 0)),
            pl.BlockSpec((n_heads, 1, tq, Lk), lambda b, i: (0, b, i, 0)),
        ),
        compiler_params=pltpu.CompilerParams(
            dimension_semantics=("parallel", "parallel"),
            vmem_limit_bytes=VMEM_LIMIT),
    )(q_in, kv_in, mask_i8, non_pad_mask,
      p["w_q"], p["b_q"], p["w_k"], p["b_k"], p["w_fc"], p["b_fc"],
      p["ln_g"], p["ln_b"])

    # (H, B, Lq, Lk) -> (H*B, Lq, Lk): contiguous reshape, matches torch layout
    return out, attn.reshape(n_heads * B, Lq, Lk)


# --------------------------------------------------------------------------
# Fused FFN kernel: linear1 + ReLU + linear2 + residual + LayerNorm + npm
# (Conv1d(k=1) over channels == pointwise linear on the feature axis)
# Hidden dim DIN is K-tiled with an f32 VMEM accumulator.
# --------------------------------------------------------------------------

def _ffn_kernel(x_ref, npm_ref, w1_ref, b1_ref, w2_ref, b2_ref,
                g_ref, beta_ref, o_ref, acc_ref):
    f32 = jnp.float32
    bf16 = jnp.bfloat16
    k = pl.program_id(1)

    @pl.when(k == 0)
    def _():
        acc_ref[...] = jnp.zeros_like(acc_ref)

    xb = x_ref[...].astype(bf16)
    h = jnp.dot(xb, w1_ref[...], preferred_element_type=f32) + b1_ref[...]
    h = jnp.maximum(h, 0.0)                        # hidden activation never leaves VMEM
    acc_ref[...] += jnp.dot(h.astype(bf16), w2_ref[...], preferred_element_type=f32)

    @pl.when(k == pl.num_programs(1) - 1)
    def _():
        y = acc_ref[...] + b2_ref[...] + x_ref[...].astype(f32)
        # TODO(synk): dropout skipped (identity at inference).
        mu = jnp.mean(y, axis=-1, keepdims=True)
        var = jnp.mean((y - mu) ** 2, axis=-1, keepdims=True)
        y = (y - mu) * lax.rsqrt(var + LN_EPS) * g_ref[...] + beta_ref[...]
        o_ref[...] = (y * npm_ref[...]).astype(o_ref.dtype)


def pallas_ffn(x, non_pad_mask, p, out_dtype=jnp.float32):
    B, L, D = x.shape
    M = B * L
    DIN = p["w1"].shape[1]

    tm = min(512, M)                           # 512-row tiles (sweet spot; v7x safe)
    Mp = pl.cdiv(M, tm) * tm                   # pad ragged row counts (keeps pipelining)
    tdin = 512 if DIN % 512 == 0 else DIN      # K-tile of the hidden dim

    x2 = x.reshape(M, D)
    npm = non_pad_mask.reshape(M, 1)
    if Mp != M:
        x2 = jnp.pad(x2, ((0, Mp - M), (0, 0)))
        npm = jnp.pad(npm, ((0, Mp - M), (0, 0)))

    out = pl.pallas_call(
        _ffn_kernel,
        out_shape=jax.ShapeDtypeStruct((Mp, D), out_dtype),
        grid=(Mp // tm, DIN // tdin),
        in_specs=[
            pl.BlockSpec((tm, D), lambda i, k: (i, 0)),
            pl.BlockSpec((tm, 1), lambda i, k: (i, 0)),
            pl.BlockSpec((D, tdin), lambda i, k: (0, k)),   # w1 K-tile (bf16)
            pl.BlockSpec((1, tdin), lambda i, k: (0, k)),   # b1 K-tile
            pl.BlockSpec((tdin, D), lambda i, k: (k, 0)),   # w2 K-tile (bf16)
            pl.BlockSpec((1, D), lambda i, k: (0, 0)),      # b2
            pl.BlockSpec((1, D), lambda i, k: (0, 0)),      # ln gamma
            pl.BlockSpec((1, D), lambda i, k: (0, 0)),      # ln beta
        ],
        out_specs=pl.BlockSpec((tm, D), lambda i, k: (i, 0)),
        scratch_shapes=[pltpu.VMEM((tm, D), jnp.float32)],
        compiler_params=pltpu.CompilerParams(
            dimension_semantics=("parallel", "arbitrary"),
            vmem_limit_bytes=VMEM_LIMIT),
    )(x2, npm, p["w1"], p["b1"], p["w2"], p["b2"], p["ln_g"], p["ln_b"])
    return out[:M].reshape(B, L, D)


# --------------------------------------------------------------------------
# DecoderLayer forward (3 fused pallas_calls total)
# --------------------------------------------------------------------------

def decoder_layer(dec_input, enc_output, non_pad_mask, self_attn_mask,
                  dec_enc_attn_mask, params, n_heads, dk, dv):
    # inter-sublayer activations carried in bf16 (halves HBM round trips)
    out, dec_self_attn = pallas_mha(dec_input, dec_input, self_attn_mask,
                                    non_pad_mask, params["self_attn"],
                                    n_heads, dk, dv, out_dtype=jnp.bfloat16)
    out, dec_enc_attn = pallas_mha(out, enc_output, dec_enc_attn_mask,
                                   non_pad_mask, params["enc_attn"],
                                   n_heads, dk, dv, out_dtype=jnp.bfloat16)
    out = pallas_ffn(out, non_pad_mask, params["pos_ffn"], out_dtype=jnp.float32)
    return out, dec_self_attn, dec_enc_attn


# --------------------------------------------------------------------------
# Deterministic parameter construction + example run
# --------------------------------------------------------------------------

def make_mha_params(key, d_models, n_heads, dk, dv):
    ks = jax.random.split(key, 3)
    std_qk = (2.0 / (d_models + dk)) ** 0.5
    w_q = std_qk * jax.random.normal(ks[0], (d_models, n_heads * dk), jnp.float32)
    w_k = std_qk * jax.random.normal(ks[1], (d_models, n_heads * dk), jnp.float32)
    std_fc = (2.0 / (n_heads * dv + d_models)) ** 0.5
    w_fc = std_fc * jax.random.normal(ks[2], (n_heads * dv, d_models), jnp.float32)
    return {
        # matmul weights stored in bf16 (f32 accumulation inside kernels)
        "w_q": w_q.astype(jnp.bfloat16),
        "b_q": jnp.zeros((1, n_heads * dk), jnp.float32),
        "w_k": w_k.astype(jnp.bfloat16),
        "b_k": jnp.zeros((1, n_heads * dk), jnp.float32),
        "w_fc": w_fc.astype(jnp.bfloat16),
        "b_fc": jnp.zeros((1, d_models), jnp.float32),
        "ln_g": jnp.ones((1, d_models), jnp.float32),
        "ln_b": jnp.zeros((1, d_models), jnp.float32),
    }


def make_ffn_params(key, d_models, din):
    ks = jax.random.split(key, 2)
    return {
        "w1": (0.05 * jax.random.normal(ks[0], (d_models, din), jnp.float32)).astype(jnp.bfloat16),
        "b1": jnp.zeros((1, din), jnp.float32),
        "w2": (0.05 * jax.random.normal(ks[1], (din, d_models), jnp.float32)).astype(jnp.bfloat16),
        "b2": jnp.zeros((1, d_models), jnp.float32),
        "ln_g": jnp.ones((1, d_models), jnp.float32),
        "ln_b": jnp.zeros((1, d_models), jnp.float32),
    }


if __name__ == "__main__":
    B, L, D = 2, 8, 32        # batch, seq, d_models
    H, DK, DV = 2, 16, 16     # heads, dk, dv (dk == dv: reference projects V with w_ks)
    DIN = 64                  # ffn hidden

    root = jax.random.PRNGKey(0)
    k_in, k_enc, k_sa, k_ea, k_ff = jax.random.split(root, 5)

    params = {
        "self_attn": make_mha_params(k_sa, D, H, DK, DV),
        "enc_attn": make_mha_params(k_ea, D, H, DK, DV),
        "pos_ffn": make_ffn_params(k_ff, D, DIN),
    }

    dec_input = jax.random.normal(k_in, (B, L, D), jnp.float32)
    enc_output = jax.random.normal(k_enc, (B, L, D), jnp.float32)

    # non-pad mask: last decoder position of batch 1 is padding
    non_pad_mask = jnp.ones((B, L, 1), jnp.float32).at[1, L - 1, 0].set(0.0)
    # causal self-attention mask (True == masked)
    causal = jnp.triu(jnp.ones((L, L), jnp.bool_), k=1)
    self_attn_mask = jnp.broadcast_to(causal, (B, L, L))
    # enc-dec mask: last two encoder key positions of batch 1 are padding
    enc_pad = jnp.zeros((B, 1, L), jnp.bool_).at[1, 0, L - 2:].set(True)
    dec_enc_attn_mask = jnp.broadcast_to(enc_pad, (B, L, L))

    out, dec_self_attn, dec_enc_attn = decoder_layer(
        dec_input, enc_output, non_pad_mask, self_attn_mask,
        dec_enc_attn_mask, params, H, DK, DV)

    jax.block_until_ready((out, dec_self_attn, dec_enc_attn))
    assert out.shape == (B, L, D)
    assert dec_self_attn.shape == (H * B, L, L)
    assert dec_enc_attn.shape == (H * B, L, L)
    print("KERNEL_OK")
</pallas_src>

<mosaic_0001>
module attributes {stable_mosaic.version = 11 : i64} {
  func.func @_mha_kernel(%arg0: i32, %arg1: i32, %arg2: memref<1x8x32xf32, #tpu.memory_space<vmem>>, %arg3: memref<1x8x32xf32, #tpu.memory_space<vmem>>, %arg4: memref<1x8x8xi8, #tpu.memory_space<vmem>>, %arg5: memref<1x8x1xf32, #tpu.memory_space<vmem>>, %arg6: memref<32x32xbf16, #tpu.memory_space<vmem>>, %arg7: memref<1x32xf32, #tpu.memory_space<vmem>>, %arg8: memref<32x32xbf16, #tpu.memory_space<vmem>>, %arg9: memref<1x32xf32, #tpu.memory_space<vmem>>, %arg10: memref<32x32xbf16, #tpu.memory_space<vmem>>, %arg11: memref<1x32xf32, #tpu.memory_space<vmem>>, %arg12: memref<1x32xf32, #tpu.memory_space<vmem>>, %arg13: memref<1x32xf32, #tpu.memory_space<vmem>>, %arg14: memref<1x8x32xbf16, #tpu.memory_space<vmem>>, %arg15: memref<2x1x8x8xbf16, #tpu.memory_space<vmem>>) attributes {dimension_semantics = [#tpu.dimension_semantics<parallel>, #tpu.dimension_semantics<parallel>], iteration_bounds = array<i64: 2, 1>, scalar_prefetch = 0 : i64, scratch_operands = 0 : i64, tpu.core_type = #tpu.core_type<tc>, window_params = [{transform_indices = @transform_0, window_bounds = array<i64: 1, 8, 32>}, {transform_indices = @transform_1, window_bounds = array<i64: 1, 8, 32>}, {transform_indices = @transform_2, window_bounds = array<i64: 1, 8, 8>}, {transform_indices = @transform_3, window_bounds = array<i64: 1, 8, 1>}, {pipeline_mode = #tpu.pipeline_mode<synchronous>, transform_indices = @transform_4, window_bounds = array<i64: 32, 32>}, {pipeline_mode = #tpu.pipeline_mode<synchronous>, transform_indices = @transform_5, window_bounds = array<i64: 1, 32>}, {pipeline_mode = #tpu.pipeline_mode<synchronous>, transform_indices = @transform_6, window_bounds = array<i64: 32, 32>}, {pipeline_mode = #tpu.pipeline_mode<synchronous>, transform_indices = @transform_7, window_bounds = array<i64: 1, 32>}, {pipeline_mode = #tpu.pipeline_mode<synchronous>, transform_indices = @transform_8, window_bounds = array<i64: 32, 32>}, {pipeline_mode = #tpu.pipeline_mode<synchronous>, transform_indices = @transform_9, window_bounds = array<i64: 1, 32>}, {pipeline_mode = #tpu.pipeline_mode<synchronous>, transform_indices = @transform_10, window_bounds = array<i64: 1, 32>}, {pipeline_mode = #tpu.pipeline_mode<synchronous>, transform_indices = @transform_11, window_bounds = array<i64: 1, 32>}, {transform_indices = @transform_12, window_bounds = array<i64: 1, 8, 32>}, {transform_indices = @transform_13, window_bounds = array<i64: 2, 1, 8, 8>}]} {
    %c0 = arith.constant 0 : index
    %c0_0 = arith.constant 0 : index
    %c0_1 = arith.constant 0 : index
    %0 = vector.load %arg2[%c0, %c0_0, %c0_1] : memref<1x8x32xf32, #tpu.memory_space<vmem>>, vector<1x8x32xf32>
    %1 = vector.shape_cast %0 : vector<1x8x32xf32> to vector<8x32xf32>
    %c0_2 = arith.constant 0 : index
    %c0_3 = arith.constant 0 : index
    %c0_4 = arith.constant 0 : index
    %2 = vector.load %arg2[%c0_2, %c0_3, %c0_4] : memref<1x8x32xf32, #tpu.memory_space<vmem>>, vector<1x8x32xf32>
    %3 = vector.shape_cast %2 : vector<1x8x32xf32> to vector<8x32xf32>
    %4 = arith.truncf %3 : vector<8x32xf32> to vector<8x32xbf16>
    %c0_5 = arith.constant 0 : index
    %c0_6 = arith.constant 0 : index
    %c0_7 = arith.constant 0 : index
    %5 = vector.load %arg3[%c0_5, %c0_6, %c0_7] : memref<1x8x32xf32, #tpu.memory_space<vmem>>, vector<1x8x32xf32>
    %6 = vector.shape_cast %5 : vector<1x8x32xf32> to vector<8x32xf32>
    %7 = arith.truncf %6 : vector<8x32xf32> to vector<8x32xbf16>
    %c0_8 = arith.constant 0 : index
    %c0_9 = arith.constant 0 : index
    %8 = vector.load %arg6[%c0_8, %c0_9] : memref<32x32xbf16, #tpu.memory_space<vmem>>, vector<32x32xbf16>
    %cst = arith.constant dense<0.000000e+00> : vector<8x32xf32>
    %9 = tpu.matmul %4, %8, %cst {dimension_numbers = #tpu.dot_dimension_numbers<[1], [0], [0], [1], [0, 0, 1, 1], [], []>} : vector<8x32xbf16>, vector<32x32xbf16>, vector<8x32xf32> -> vector<8x32xf32>
    %c0_10 = arith.constant 0 : index
    %c0_11 = arith.constant 0 : index
    %10 = vector.load %arg7[%c0_10, %c0_11] : memref<1x32xf32, #tpu.memory_space<vmem>>, vector<1x32xf32>
    %11 = vector.broadcast %10 : vector<1x32xf32> to vector<8x32xf32>
    %12 = arith.addf %9, %11 : vector<8x32xf32>
    %cst_12 = arith.constant 1.250000e-01 : f32
    %13 = vector.broadcast %cst_12 : f32 to vector<8x32xf32>
    %14 = arith.mulf %12, %13 : vector<8x32xf32>
    %c0_13 = arith.constant 0 : index
    %c0_14 = arith.constant 0 : index
    %15 = vector.load %arg8[%c0_13, %c0_14] : memref<32x32xbf16, #tpu.memory_space<vmem>>, vector<32x32xbf16>
    %cst_15 = arith.constant dense<0.000000e+00> : vector<8x32xf32>
    %16 = tpu.matmul %7, %15, %cst_15 {dimension_numbers = #tpu.dot_dimension_numbers<[1], [0], [0], [1], [0, 0, 1, 1], [], []>} : vector<8x32xbf16>, vector<32x32xbf16>, vector<8x32xf32> -> vector<8x32xf32>
    %c0_16 = arith.constant 0 : index
    %c0_17 = arith.constant 0 : index
    %17 = vector.load %arg9[%c0_16, %c0_17] : memref<1x32xf32, #tpu.memory_space<vmem>>, vector<1x32xf32>
    %18 = vector.broadcast %17 : vector<1x32xf32> to vector<8x32xf32>
    %19 = arith.addf %16, %18 : vector<8x32xf32>
    %20 = vector.shape_cast %14 : vector<8x32xf32> to vector<8x2x16xf32>
    %21 = tpu.transpose %20, [1, 0, 2] : vector<8x2x16xf32> -> vector<2x8x16xf32>
    %22 = arith.truncf %21 : vector<2x8x16xf32> to vector<2x8x16xbf16>
    %23 = vector.shape_cast %19 : vector<8x32xf32> to vector<8x2x16xf32>
    %24 = tpu.transpose %23, [1, 0, 2] : vector<8x2x16xf32> -> vector<2x8x16xf32>
    %25 = arith.truncf %24 : vector<2x8x16xf32> to vector<2x8x16xbf16>
    %cst_18 = arith.constant dense<0.000000e+00> : vector<2x8x8xf32>
    %26 = tpu.matmul %22, %25, %cst_18 {dimension_numbers = #tpu.dot_dimension_numbers<[2], [2], [1], [1], [0, 0, 0, 1, 1, 1], [0], [0]>} : vector<2x8x16xbf16>, vector<2x8x16xbf16>, vector<2x8x8xf32> -> vector<2x8x8xf32>
    %c0_19 = arith.constant 0 : index
    %c0_20 = arith.constant 0 : index
    %c0_21 = arith.constant 0 : index
    %27 = vector.load %arg4[%c0_19, %c0_20, %c0_21] : memref<1x8x8xi8, #tpu.memory_space<vmem>>, vector<1x8x8xi8>
    %28 = vector.shape_cast %27 : vector<1x8x8xi8> to vector<8x8xi8>
    %29 = arith.sitofp %28 : vector<8x8xi8> to vector<8x8xf32>
    %cst_22 = arith.constant -1.000000e+30 : f32
    %30 = vector.broadcast %cst_22 : f32 to vector<8x8xf32>
    %31 = arith.mulf %29, %30 : vector<8x8xf32>
    %32 = vector.shape_cast %31 : vector<8x8xf32> to vector<1x8x8xf32>
    %33 = vector.broadcast %32 : vector<1x8x8xf32> to vector<2x8x8xf32>
    %34 = arith.addf %26, %33 : vector<2x8x8xf32>
    %cst_23 = arith.constant dense<0xFF800000> : vector<2x8xf32>
    %35 = vector.multi_reduction <maximumf>, %34, %cst_23 [2] : vector<2x8x8xf32> to vector<2x8xf32>
    %36 = vector.shape_cast %35 : vector<2x8xf32> to vector<2x8x1xf32>
    %37 = vector.broadcast %36 : vector<2x8x1xf32> to vector<2x8x8xf32>
    %38 = arith.subf %34, %37 : vector<2x8x8xf32>
    %39 = math.exp %38 : vector<2x8x8xf32>
    %cst_24 = arith.constant dense<0.000000e+00> : vector<2x8xf32>
    %40 = vector.multi_reduction <add>, %39, %cst_24 [2] : vector<2x8x8xf32> to vector<2x8xf32>
    %41 = vector.shape_cast %40 : vector<2x8xf32> to vector<2x8x1xf32>
    %42 = vector.broadcast %41 : vector<2x8x1xf32> to vector<2x8x8xf32>
    %43 = arith.divf %39, %42 : vector<2x8x8xf32>
    %44 = arith.truncf %43 : vector<2x8x8xf32> to vector<2x8x8xbf16>
    %c0_25 = arith.constant 0 : index
    %c0_26 = arith.constant 0 : index
    %c0_27 = arith.constant 0 : index
    %c0_28 = arith.constant 0 : index
    %45 = vector.load %arg15[%c0_25, %c0_26, %c0_27, %c0_28] : memref<2x1x8x8xbf16, #tpu.memory_space<vmem>>, vector<2x1x8x8xbf16>
    %46 = vector.shape_cast %45 : vector<2x1x8x8xbf16> to vector<2x8x8xbf16>
    %47 = vector.shape_cast %44 : vector<2x8x8xbf16> to vector<2x1x8x8xbf16>
    tpu.vector_store %arg15[%c0_25, %c0_26, %c0_27, %c0_28], %47 {strides = array<i32>} : memref<2x1x8x8xbf16, #tpu.memory_space<vmem>>, vector<2x1x8x8xbf16>,
    %48 = arith.truncf %43 : vector<2x8x8xf32> to vector<2x8x8xbf16>
    %cst_29 = arith.constant dense<0.000000e+00> : vector<2x8x16xf32>
    %49 = tpu.matmul %48, %25, %cst_29 {dimension_numbers = #tpu.dot_dimension_numbers<[2], [1], [1], [2], [0, 0, 0, 1, 1, 2], [0], [0]>} : vector<2x8x8xbf16>, vector<2x8x16xbf16>, vector<2x8x16xf32> -> vector<2x8x16xf32>
    %50 = tpu.transpose %49, [1, 0, 2] : vector<2x8x16xf32> -> vector<8x2x16xf32>
    %51 = vector.shape_cast %50 : vector<8x2x16xf32> to vector<8x32xf32>
    %52 = arith.truncf %51 : vector<8x32xf32> to vector<8x32xbf16>
    %c0_30 = arith.constant 0 : index
    %c0_31 = arith.constant 0 : index
    %53 = vector.load %arg10[%c0_30, %c0_31] : memref<32x32xbf16, #tpu.memory_space<vmem>>, vector<32x32xbf16>
    %cst_32 = arith.constant dense<0.000000e+00> : vector<8x32xf32>
    %54 = tpu.matmul %52, %53, %cst_32 {dimension_numbers = #tpu.dot_dimension_numbers<[1], [0], [0], [1], [0, 0, 1, 1], [], []>} : vector<8x32xbf16>, vector<32x32xbf16>, vector<8x32xf32> -> vector<8x32xf32>
    %c0_33 = arith.constant 0 : index
    %c0_34 = arith.constant 0 : index
    %55 = vector.load %arg11[%c0_33, %c0_34] : memref<1x32xf32, #tpu.memory_space<vmem>>, vector<1x32xf32>
    %56 = vector.broadcast %55 : vector<1x32xf32> to vector<8x32xf32>
    %57 = arith.addf %54, %56 : vector<8x32xf32>
    %58 = arith.addf %57, %1 : vector<8x32xf32>
    %cst_35 = arith.constant dense<0.000000e+00> : vector<8xf32>
    %59 = vector.multi_reduction <add>, %58, %cst_35 [1] : vector<8x32xf32> to vector<8xf32>
    %60 = vector.shape_cast %59 : vector<8xf32> to vector<8x1xf32>
    %cst_36 = arith.constant 3.200000e+01 : f32
    %61 = vector.broadcast %cst_36 : f32 to vector<8x1xf32>
    %62 = arith.divf %60, %61 : vector<8x1xf32>
    %63 = vector.broadcast %62 : vector<8x1xf32> to vector<8x32xf32>
    %64 = arith.subf %58, %63 : vector<8x32xf32>
    %65 = arith.mulf %64, %64 : vector<8x32xf32>
    %cst_37 = arith.constant dense<0.000000e+00> : vector<8xf32>
    %66 = vector.multi_reduction <add>, %65, %cst_37 [1] : vector<8x32xf32> to vector<8xf32>
    %67 = vector.shape_cast %66 : vector<8xf32> to vector<8x1xf32>
    %cst_38 = arith.constant 3.200000e+01 : f32
    %68 = vector.broadcast %cst_38 : f32 to vector<8x1xf32>
    %69 = arith.divf %67, %68 : vector<8x1xf32>
    %70 = vector.broadcast %62 : vector<8x1xf32> to vector<8x32xf32>
    %71 = arith.subf %58, %70 : vector<8x32xf32>
    %cst_39 = arith.constant 9.99999974E-6 : f32
    %72 = vector.broadcast %cst_39 : f32 to vector<8x1xf32>
    %73 = arith.addf %69, %72 : vector<8x1xf32>
    %74 = math.rsqrt %73 : vector<8x1xf32>
    %75 = vector.broadcast %74 : vector<8x1xf32> to vector<8x32xf32>
    %76 = arith.mulf %71, %75 : vector<8x32xf32>
    %c0_40 = arith.constant 0 : index
    %c0_41 = arith.constant 0 : index
    %77 = vector.load %arg12[%c0_40, %c0_41] : memref<1x32xf32, #tpu.memory_space<vmem>>, vector<1x32xf32>
    %78 = vector.broadcast %77 : vector<1x32xf32> to vector<8x32xf32>
    %79 = arith.mulf %76, %78 : vector<8x32xf32>
    %c0_42 = arith.constant 0 : index
    %c0_43 = arith.constant 0 : index
    %80 = vector.load %arg13[%c0_42, %c0_43] : memref<1x32xf32, #tpu.memory_space<vmem>>, vector<1x32xf32>
    %81 = vector.broadcast %80 : vector<1x32xf32> to vector<8x32xf32>
    %82 = arith.addf %79, %81 : vector<8x32xf32>
    %c0_44 = arith.constant 0 : index
    %c0_45 = arith.constant 0 : index
    %c0_46 = arith.constant 0 : index
    %83 = vector.load %arg5[%c0_44, %c0_45, %c0_46] : memref<1x8x1xf32, #tpu.memory_space<vmem>>, vector<1x8x1xf32>
    %84 = vector.shape_cast %83 : vector<1x8x1xf32> to vector<8x1xf32>
    %85 = vector.broadcast %84 : vector<8x1xf32> to vector<8x32xf32>
    %86 = arith.mulf %82, %85 : vector<8x32xf32>
    %87 = arith.truncf %86 : vector<8x32xf32> to vector<8x32xbf16>
    %c0_47 = arith.constant 0 : index
    %c0_48 = arith.constant 0 : index
    %c0_49 = arith.constant 0 : index
    %88 = vector.load %arg14[%c0_47, %c0_48, %c0_49] : memref<1x8x32xbf16, #tpu.memory_space<vmem>>, vector<1x8x32xbf16>
    %89 = vector.shape_cast %88 : vector<1x8x32xbf16> to vector<8x32xbf16>
    %90 = vector.shape_cast %87 : vector<8x32xbf16> to vector<1x8x32xbf16>
    tpu.vector_store %arg14[%c0_47, %c0_48, %c0_49], %90 {strides = array<i32>} : memref<1x8x32xbf16, #tpu.memory_space<vmem>>, vector<1x8x32xbf16>,
    return
  }
  func.func @transform_0(%arg0: i32, %arg1: i32) -> (i32, i32, i32) {
    %c0_i32 = arith.constant 0 : i32
    %c0_i32_0 = arith.constant 0 : i32
    return %arg0, %arg1, %c0_i32 : i32, i32, i32
  }
  func.func @transform_1(%arg0: i32, %arg1: i32) -> (i32, i32, i32) {
    %c0_i32 = arith.constant 0 : i32
    %c0_i32_0 = arith.constant 0 : i32
    %c0_i32_1 = arith.constant 0 : i32
    return %arg0, %c0_i32, %c0_i32_0 : i32, i32, i32
  }
  func.func @transform_2(%arg0: i32, %arg1: i32) -> (i32, i32, i32) {
    %c0_i32 = arith.constant 0 : i32
    %c0_i32_0 = arith.constant 0 : i32
    return %arg0, %arg1, %c0_i32 : i32, i32, i32
  }
  func.func @transform_3(%arg0: i32, %arg1: i32) -> (i32, i32, i32) {
    %c0_i32 = arith.constant 0 : i32
    %c0_i32_0 = arith.constant 0 : i32
    return %arg0, %arg1, %c0_i32 : i32, i32, i32
  }
  func.func @transform_4(%arg0: i32, %arg1: i32) -> (i32, i32) {
    %c0_i32 = arith.constant 0 : i32
    %c0_i32_0 = arith.constant 0 : i32
    %c0_i32_1 = arith.constant 0 : i32
    return %c0_i32, %c0_i32_0 : i32, i32
  }
  func.func @transform_5(%arg0: i32, %arg1: i32) -> (i32, i32) {
    %c0_i32 = arith.constant 0 : i32
    %c0_i32_0 = arith.constant 0 : i32
    %c0_i32_1 = arith.constant 0 : i32
    return %c0_i32, %c0_i32_0 : i32, i32
  }
  func.func @transform_6(%arg0: i32, %arg1: i32) -> (i32, i32) {
    %c0_i32 = arith.constant 0 : i32
    %c0_i32_0 = arith.constant 0 : i32
    %c0_i32_1 = arith.constant 0 : i32
    return %c0_i32, %c0_i32_0 : i32, i32
  }
  func.func @transform_7(%arg0: i32, %arg1: i32) -> (i32, i32) {
    %c0_i32 = arith.constant 0 : i32
    %c0_i32_0 = arith.constant 0 : i32
    %c0_i32_1 = arith.constant 0 : i32
    return %c0_i32, %c0_i32_0 : i32, i32
  }
  func.func @transform_8(%arg0: i32, %arg1: i32) -> (i32, i32) {
    %c0_i32 = arith.constant 0 : i32
    %c0_i32_0 = arith.constant 0 : i32
    %c0_i32_1 = arith.constant 0 : i32
    return %c0_i32, %c0_i32_0 : i32, i32
  }
  func.func @transform_9(%arg0: i32, %arg1: i32) -> (i32, i32) {
    %c0_i32 = arith.constant 0 : i32
    %c0_i32_0 = arith.constant 0 : i32
    %c0_i32_1 = arith.constant 0 : i32
    return %c0_i32, %c0_i32_0 : i32, i32
  }
  func.func @transform_10(%arg0: i32, %arg1: i32) -> (i32, i32) {
    %c0_i32 = arith.constant 0 : i32
    %c0_i32_0 = arith.constant 0 : i32
    %c0_i32_1 = arith.constant 0 : i32
    return %c0_i32, %c0_i32_0 : i32, i32
  }
  func.func @transform_11(%arg0: i32, %arg1: i32) -> (i32, i32) {
    %c0_i32 = arith.constant 0 : i32
    %c0_i32_0 = arith.constant 0 : i32
    %c0_i32_1 = arith.constant 0 : i32
    return %c0_i32, %c0_i32_0 : i32, i32
  }
  func.func @transform_12(%arg0: i32, %arg1: i32) -> (i32, i32, i32) {
    %c0_i32 = arith.constant 0 : i32
    %c0_i32_0 = arith.constant 0 : i32
    return %arg0, %arg1, %c0_i32 : i32, i32, i32
  }
  func.func @transform_13(%arg0: i32, %arg1: i32) -> (i32, i32, i32, i32) {
    %c0_i32 = arith.constant 0 : i32
    %c0_i32_0 = arith.constant 0 : i32
    %c0_i32_1 = arith.constant 0 : i32
    return %c0_i32, %arg0, %arg1, %c0_i32_0 : i32, i32, i32, i32
  }
}

</mosaic_0001>

<llo_original>
// kernel: tpu_custom_call.1
$region0: #{tpu_custom_call.1}
  #allocation0 [shape = 'u32[]', space=smem, size = 0x4, offset = 0x4, fixed_abs, tag = 'smem constant byte address 0x4 - core index']
  #allocation1 [shape = 'u32[144,128]{1,0:T(1,128)}', space=vmem, size = 0x12000, scoped, tag = 'internal scratch']
  %s0 = inlined_call_operand.vmem [shape: f32[2,8,32], index: 0, kind: input, shape index: {}]
  %s1 = inlined_call_operand.hbm [shape: f32[2,8,32], index: 1, kind: input, shape index: {}]
  %s2 = inlined_call_operand.hbm [shape: s8[2,8,8], index: 2, kind: input, shape index: {}]
  %s3 = inlined_call_operand.vmem [shape: f32[2,8,1], index: 3, kind: input, shape index: {}]
  %s4 = inlined_call_operand.hbm [shape: bf16[32,32], index: 4, kind: input, shape index: {}]
  %s5 = inlined_call_operand.hbm [shape: f32[1,32], index: 5, kind: input, shape index: {}]
  %s6 = inlined_call_operand.hbm [shape: bf16[32,32], index: 6, kind: input, shape index: {}]
  %s7 = inlined_call_operand.hbm [shape: f32[1,32], index: 7, kind: input, shape index: {}]
  %s8 = inlined_call_operand.vmem [shape: bf16[32,32], index: 8, kind: input, shape index: {}]
  %s9 = inlined_call_operand.vmem [shape: f32[1,32], index: 9, kind: input, shape index: {}]
  %s10 = inlined_call_operand.vmem [shape: f32[1,32], index: 10, kind: input, shape index: {}]
  %s11 = inlined_call_operand.vmem [shape: f32[1,32], index: 11, kind: input, shape index: {}]
  %s12 = inlined_call_operand.hbm [shape: bf16[2,8,32], index: 12, kind: output, shape index: {0}]
  %s13 = inlined_call_operand.hbm [shape: bf16[2,2,8,8], index: 13, kind: output, shape index: {1}]
  %14 = xla_tuple %s12, %s13
  %s15 = sld [smem:[#allocation0]]
  $region113: #{tpu_custom_call.1} parent=0
    _
  %s17 = ssub.s32 1, %s15
  %s18 = scalar_select 0, %s17, %s15
  $region1: #{tpu_custom_call.1} parent=0
    #allocation2 [shape = 'u8[8192]{0}', space=vmem, size = 0x2000, scoped, tag = 'input window, operand 1']
    #allocation3 [shape = 's32[2]{0}', space=sflag, size = 0x8, scoped, tag = 'scoped memory for tpu_custom_call.1']
    #allocation4 [shape = 's32[2]{0}', space=sflag, size = 0x8, scoped, tag = 'scoped memory for tpu_custom_call.1']
    #allocation5 [shape = 'u8[2048]{0}', space=vmem, size = 0x800, scoped, tag = 'input window, operand 2']
    #allocation6 [shape = 's32[2]{0}', space=sflag, size = 0x8, scoped, tag = 'scoped memory for tpu_custom_call.1']
    #allocation7 [shape = 'u8[8192]{0}', space=vmem, size = 0x2000, scoped, tag = 'input window, operand 4, single buffered']
    #allocation8 [shape = 'u8[512]{0}', space=vmem, size = 0x400, scoped, tag = 'input window, operand 5, single buffered']
    #allocation9 [shape = 's32[1]{0}', space=sflag, size = 0x4, scoped, tag = 'scoped memory for tpu_custom_call.1']
    #allocation10 [shape = 'u8[8192]{0}', space=vmem, size = 0x2000, scoped, tag = 'input window, operand 6, single buffered']
    #allocation11 [shape = 'u8[512]{0}', space=vmem, size = 0x400, scoped, tag = 'input window, operand 7, single buffered']
    #allocation12 [shape = 's32[1]{0}', space=sflag, size = 0x4, scoped, tag = 'scoped memory for tpu_custom_call.1']
    #allocation13 [shape = 'u8[4096]{0}', space=vmem, size = 0x1000, scoped, tag = 'output window, operand 0']
    #allocation14 [shape = 'u8[8192]{0}', space=vmem, size = 0x2000, scoped, tag = 'output window, operand 1']
    #allocation15 [shape = 's32[2]{0}', space=sflag, size = 0x8, scoped, tag = 'scoped memory for tpu_custom_call.1']
    %19 = vsyncpa [#allocation3], 0
    %s20 = scalar_lea.sflag [#allocation3], 1
    %21 = vsyncpa %s20, 0
    %22 = vsyncpa [#allocation6], 0
    %s23 = scalar_lea.sflag [#allocation6], 1
    %24 = vsyncpa %s23, 0
    %25 = vsyncpa [#allocation9], 0
    %26 = vsyncpa [#allocation12], 0
    %27 = vsyncpa [#allocation4], 0
    %s28 = scalar_lea.sflag [#allocation4], 1
    %29 = vsyncpa %s28, 0
    %30 = vsyncpa [#allocation15], 0
    %s31 = scalar_lea.sflag [#allocation15], 1
    %32 = vsyncpa %s31, 0
    loop: start=0, step=1, limit=4
    $region2: #{tpu_custom_call.1} parent=1 // loop_pre_header
      _
    $region3: #{tpu_custom_call.1} parent=1 // loop_header
      %s34 = sphi 0, %s38
      %p35 = scmp.ge.s32.totalorder %s34, 4
      %s41 = sphi 0, %s53
      %s42 = sphi 0, %s49
      %s43 = sphi 0, %s41
      %s44 = sphi 0, %s42
      %s45 = sphi 0, %s43
      %s46 = sphi 0, %s44
      %s58 = sphi 0, %s60
      %s61 = sphi 0, %s58
      %s62 = sphi 0, %s61
      %s78 = sphi 0, %s62
      %s84 = sphi 0, %s86
      %s87 = sphi 0, %s84
      %s88 = sphi 0, %s87
      %s104 = sphi 0, %s88
      %s112 = sphi 0, %s114
      %s115 = sphi 0, %s112
      %s116 = sphi 0, %s115
      %s132 = sphi 0, %s116
      %s140 = sphi 0, %s142
      %s143 = sphi 0, %s140
      %s144 = sphi 0, %s143
      %s160 = sphi 0, %s144
      %s164 = sphi 0, %s164
      %s166 = sphi 0, %s164
      %s167 = sphi 0, %s166
      %s181 = sphi 0, %s167
      %s185 = sphi 0, %s185
      %s187 = sphi 0, %s185
      %s188 = sphi 0, %s187
      %s202 = sphi 0, %s188
      %s206 = sphi 0, %s206
      %s208 = sphi 0, %s206
      %s209 = sphi 0, %s208
      %s223 = sphi 0, %s209
      %s227 = sphi 0, %s227
      %s229 = sphi 0, %s227
      %s230 = sphi 0, %s229
      %s244 = sphi 0, %s230
      %s248 = sphi 0, %s248
      %s250 = sphi 0, %s248
      %s251 = sphi 0, %s250
      %s265 = sphi 0, %s251
      %s269 = sphi 0, %s269
      %s271 = sphi 0, %s269
      %s272 = sphi 0, %s271
      %s286 = sphi 0, %s272
      %s290 = sphi 0, %s290
      %s292 = sphi 0, %s290
      %s293 = sphi 0, %s292
      %s307 = sphi 0, %s293
      %s311 = sphi 0, %s311
      %s313 = sphi 0, %s311
      %s314 = sphi 0, %s313
      %s328 = sphi 0, %s314
      %s336 = sphi 0, %s338
      %s339 = sphi 0, %s336
      %s340 = sphi 0, %s339
      %s356 = sphi 0, %s340
      %s364 = sphi 0, %s366
      %s367 = sphi 0, %s364
      %s368 = sphi 0, %s367
      %s384 = sphi 0, %s368
    $region4: #{tpu_custom_call.1} parent=1 // loop_header_branch
      %37 = sbr.rel (%p35) target = $region8
    $region5: #{tpu_custom_call.1} parent=1 // loop_body
      %s39 = ssub.s32 %s34, 1
      %s40 = ssub.s32 %s34, 2
      %s47 = sadd.s32 1, %s42
      %p48 = scmp.ge.s32.totalorder %s47, 1
      %s49 = scalar_select %p48, 0, %s47
      %s50 = sadd.s32 1, %s41
      %s51 = scalar_select %p48, %s50, %s41
      %p52 = scmp.ge.s32.totalorder %s51, 2
      %s53 = scalar_select %p52, 0, %s51
      %s54 = ssub.s32 %s41, %s53
      %s55 = ssub.s32 %s42, %s49
      %s56 = sor.u32 %s54, %s55
      %p57 = scmp.eq.s32.totalorder %s56, 0
      %s59 = sadd.s32 %s58, 1
      %s60 = scalar_select %p57, %s58, %s59
      %p63 = pneg %p57
      %p64 = scmp.eq.s32.totalorder %s34, 1
      %p65 = por %p63, %p64
      %p66 = scmp.ne.s32.totalorder %s58, %s61
      %p67 = scmp.eq.s32.totalorder %s34, 0
      %p68 = por %p66, %p67
      %p69 = scmp.ne.s32.totalorder %s58, %s61
      %p70 = scmp.eq.s32.totalorder %s39, 1
      %p71 = por %p69, %p70
      %p72 = scmp.ne.s32.totalorder %s61, %s62
      %p73 = scmp.eq.s32.totalorder %s39, 0
      %p74 = por %p72, %p73
      %p75 = scmp.ne.s32.totalorder %s61, %s62
      %p76 = scmp.eq.s32.totalorder %s40, 1
      %p77 = por %p75, %p76
      %p79 = scmp.ne.s32.totalorder %s62, %s78
      %p80 = scmp.eq.s32.totalorder %s40, 0
      %p81 = por %p79, %p80
      %s82 = ssub.s32 %s41, %s53
      %p83 = scmp.eq.s32.totalorder %s82, 0
      %s85 = sadd.s32 %s84, 1
      %s86 = scalar_select %p83, %s84, %s85
      %p89 = pneg %p83
      %p90 = scmp.eq.s32.totalorder %s34, 1
      %p91 = por %p89, %p90
      %p92 = scmp.ne.s32.totalorder %s84, %s87
      %p93 = scmp.eq.s32.totalorder %s34, 0
      %p94 = por %p92, %p93
      %p95 = scmp.ne.s32.totalorder %s84, %s87
      %p96 = scmp.eq.s32.totalorder %s39, 1
      %p97 = por %p95, %p96
      %p98 = scmp.ne.s32.totalorder %s87, %s88
      %p99 = scmp.eq.s32.totalorder %s39, 0
      %p100 = por %p98, %p99
      %p101 = scmp.ne.s32.totalorder %s87, %s88
      %p102 = scmp.eq.s32.totalorder %s40, 1
      %p103 = por %p101, %p102
      %p105 = scmp.ne.s32.totalorder %s88, %s104
      %p106 = scmp.eq.s32.totalorder %s40, 0
      %p107 = por %p105, %p106
      %s108 = ssub.s32 %s41, %s53
      %s109 = ssub.s32 %s42, %s49
      %s110 = sor.u32 %s108, %s109
      %p111 = scmp.eq.s32.totalorder %s110, 0
      %s113 = sadd.s32 %s112, 1
      %s114 = scalar_select %p111, %s112, %s113
      %p117 = pneg %p111
      %p118 = scmp.eq.s32.totalorder %s34, 1
      %p119 = por %p117, %p118
      %p120 = scmp.ne.s32.totalorder %s112, %s115
      %p121 = scmp.eq.s32.totalorder %s34, 0
      %p122 = por %p120, %p121
      %p123 = scmp.ne.s32.totalorder %s112, %s115
      %p124 = scmp.eq.s32.totalorder %s39, 1
      %p125 = por %p123, %p124
      %p126 = scmp.ne.s32.totalorder %s115, %s116
      %p127 = scmp.eq.s32.totalorder %s39, 0
      %p128 = por %p126, %p127
      %p129 = scmp.ne.s32.totalorder %s115, %s116
      %p130 = scmp.eq.s32.totalorder %s40, 1
      %p131 = por %p129, %p130
      %p133 = scmp.ne.s32.totalorder %s116, %s132
      %p134 = scmp.eq.s32.totalorder %s40, 0
      %p135 = por %p133, %p134
      %s136 = ssub.s32 %s41, %s53
      %s137 = ssub.s32 %s42, %s49
      %s138 = sor.u32 %s136, %s137
      %p139 = scmp.eq.s32.totalorder %s138, 0
      %s141 = sadd.s32 %s140, 1
      %s142 = scalar_select %p139, %s140, %s141
      %p145 = pneg %p139
      %p146 = scmp.eq.s32.totalorder %s34, 1
      %p147 = por %p145, %p146
      %p148 = scmp.ne.s32.totalorder %s140, %s143
      %p149 = scmp.eq.s32.totalorder %s34, 0
      %p150 = por %p148, %p149
      %p151 = scmp.ne.s32.totalorder %s140, %s143
      %p152 = scmp.eq.s32.totalorder %s39, 1
      %p153 = por %p151, %p152
      %p154 = scmp.ne.s32.totalorder %s143, %s144
      %p155 = scmp.eq.s32.totalorder %s39, 0
      %p156 = por %p154, %p155
      %p157 = scmp.ne.s32.totalorder %s143, %s144
      %p158 = scmp.eq.s32.totalorder %s40, 1
      %p159 = por %p157, %p158
      %p161 = scmp.ne.s32.totalorder %s144, %s160
      %p162 = scmp.eq.s32.totalorder %s40, 0
      %p163 = por %p161, %p162
      %s165 = sadd.s32 %s164, 1
      %p168 = scmp.eq.s32.totalorder %s34, 1
      %p169 = scmp.ne.s32.totalorder %s164, %s166
      %p170 = scmp.eq.s32.totalorder %s34, 0
      %p171 = por %p169, %p170
      %p172 = scmp.ne.s32.totalorder %s164, %s166
      %p173 = scmp.eq.s32.totalorder %s39, 1
      %p174 = por %p172, %p173
      %p175 = scmp.ne.s32.totalorder %s166, %s167
      %p176 = scmp.eq.s32.totalorder %s39, 0
      %p177 = por %p175, %p176
      %p178 = scmp.ne.s32.totalorder %s166, %s167
      %p179 = scmp.eq.s32.totalorder %s40, 1
      %p180 = por %p178, %p179
      %p182 = scmp.ne.s32.totalorder %s167, %s181
      %p183 = scmp.eq.s32.totalorder %s40, 0
      %p184 = por %p182, %p183
      %s186 = sadd.s32 %s185, 1
      %p189 = scmp.eq.s32.totalorder %s34, 1
      %p190 = scmp.ne.s32.totalorder %s185, %s187
      %p191 = scmp.eq.s32.totalorder %s34, 0
      %p192 = por %p190, %p191
      %p193 = scmp.ne.s32.totalorder %s185, %s187
      %p194 = scmp.eq.s32.totalorder %s39, 1
      %p195 = por %p193, %p194
      %p196 = scmp.ne.s32.totalorder %s187, %s188
      %p197 = scmp.eq.s32.totalorder %s39, 0
      %p198 = por %p196, %p197
      %p199 = scmp.ne.s32.totalorder %s187, %s188
      %p200 = scmp.eq.s32.totalorder %s40, 1
      %p201 = por %p199, %p200
      %p203 = scmp.ne.s32.totalorder %s188, %s202
      %p204 = scmp.eq.s32.totalorder %s40, 0
      %p205 = por %p203, %p204
      %s207 = sadd.s32 %s206, 1
      %p210 = scmp.eq.s32.totalorder %s34, 1
      %p211 = scmp.ne.s32.totalorder %s206, %s208
      %p212 = scmp.eq.s32.totalorder %s34, 0
      %p213 = por %p211, %p212
      %p214 = scmp.ne.s32.totalorder %s206, %s208
      %p215 = scmp.eq.s32.totalorder %s39, 1
      %p216 = por %p214, %p215
      %p217 = scmp.ne.s32.totalorder %s208, %s209
      %p218 = scmp.eq.s32.totalorder %s39, 0
      %p219 = por %p217, %p218
      %p220 = scmp.ne.s32.totalorder %s208, %s209
      %p221 = scmp.eq.s32.totalorder %s40, 1
      %p222 = por %p220, %p221
      %p224 = scmp.ne.s32.totalorder %s209, %s223
      %p225 = scmp.eq.s32.totalorder %s40, 0
      %p226 = por %p224, %p225
      %s228 = sadd.s32 %s227, 1
      %p231 = scmp.eq.s32.totalorder %s34, 1
      %p232 = scmp.ne.s32.totalorder %s227, %s229
      %p233 = scmp.eq.s32.totalorder %s34, 0
      %p234 = por %p232, %p233
      %p235 = scmp.ne.s32.totalorder %s227, %s229
      %p236 = scmp.eq.s32.totalorder %s39, 1
      %p237 = por %p235, %p236
      %p238 = scmp.ne.s32.totalorder %s229, %s230
      %p239 = scmp.eq.s32.totalorder %s39, 0
      %p240 = por %p238, %p239
      %p241 = scmp.ne.s32.totalorder %s229, %s230
      %p242 = scmp.eq.s32.totalorder %s40, 1
      %p243 = por %p241, %p242
      %p245 = scmp.ne.s32.totalorder %s230, %s244
      %p246 = scmp.eq.s32.totalorder %s40, 0
      %p247 = por %p245, %p246
      %s249 = sadd.s32 %s248, 1
      %p252 = scmp.eq.s32.totalorder %s34, 1
      %p253 = scmp.ne.s32.totalorder %s248, %s250
      %p254 = scmp.eq.s32.totalorder %s34, 0
      %p255 = por %p253, %p254
      %p256 = scmp.ne.s32.totalorder %s248, %s250
      %p257 = scmp.eq.s32.totalorder %s39, 1
      %p258 = por %p256, %p257
      %p259 = scmp.ne.s32.totalorder %s250, %s251
      %p260 = scmp.eq.s32.totalorder %s39, 0
      %p261 = por %p259, %p260
      %p262 = scmp.ne.s32.totalorder %s250, %s251
      %p263 = scmp.eq.s32.totalorder %s40, 1
      %p264 = por %p262, %p263
      %p266 = scmp.ne.s32.totalorder %s251, %s265
      %p267 = scmp.eq.s32.totalorder %s40, 0
      %p268 = por %p266, %p267
      %s270 = sadd.s32 %s269, 1
      %p273 = scmp.eq.s32.totalorder %s34, 1
      %p274 = scmp.ne.s32.totalorder %s269, %s271
      %p275 = scmp.eq.s32.totalorder %s34, 0
      %p276 = por %p274, %p275
      %p277 = scmp.ne.s32.totalorder %s269, %s271
      %p278 = scmp.eq.s32.totalorder %s39, 1
      %p279 = por %p277, %p278
      %p280 = scmp.ne.s32.totalorder %s271, %s272
      %p281 = scmp.eq.s32.totalorder %s39, 0
      %p282 = por %p280, %p281
      %p283 = scmp.ne.s32.totalorder %s271, %s272
      %p284 = scmp.eq.s32.totalorder %s40, 1
      %p285 = por %p283, %p284
      %p287 = scmp.ne.s32.totalorder %s272, %s286
      %p288 = scmp.eq.s32.totalorder %s40, 0
      %p289 = por %p287, %p288
      %s291 = sadd.s32 %s290, 1
      %p294 = scmp.eq.s32.totalorder %s34, 1
      %p295 = scmp.ne.s32.totalorder %s290, %s292
      %p296 = scmp.eq.s32.totalorder %s34, 0
      %p297 = por %p295, %p296
      %p298 = scmp.ne.s32.totalorder %s290, %s292
      %p299 = scmp.eq.s32.totalorder %s39, 1
      %p300 = por %p298, %p299
      %p301 = scmp.ne.s32.totalorder %s292, %s293
      %p302 = scmp.eq.s32.totalorder %s39, 0
      %p303 = por %p301, %p302
      %p304 = scmp.ne.s32.totalorder %s292, %s293
      %p305 = scmp.eq.s32.totalorder %s40, 1
      %p306 = por %p304, %p305
      %p308 = scmp.ne.s32.totalorder %s293, %s307
      %p309 = scmp.eq.s32.totalorder %s40, 0
      %p310 = por %p308, %p309
      %s312 = sadd.s32 %s311, 1
      %p315 = scmp.eq.s32.totalorder %s34, 1
      %p316 = scmp.ne.s32.totalorder %s311, %s313
      %p317 = scmp.eq.s32.totalorder %s34, 0
      %p318 = por %p316, %p317
      %p319 = scmp.ne.s32.totalorder %s311, %s313
      %p320 = scmp.eq.s32.totalorder %s39, 1
      %p321 = por %p319, %p320
      %p322 = scmp.ne.s32.totalorder %s313, %s314
      %p323 = scmp.eq.s32.totalorder %s39, 0
      %p324 = por %p322, %p323
      %p325 = scmp.ne.s32.totalorder %s313, %s314
      %p326 = scmp.eq.s32.totalorder %s40, 1
      %p327 = por %p325, %p326
      %p329 = scmp.ne.s32.totalorder %s314, %s328
      %p330 = scmp.eq.s32.totalorder %s40, 0
      %p331 = por %p329, %p330
      %s332 = ssub.s32 %s41, %s53
      %s333 = ssub.s32 %s42, %s49
      %s334 = sor.u32 %s332, %s333
      %p335 = scmp.eq.s32.totalorder %s334, 0
      %s337 = sadd.s32 %s336, 1
      %s338 = scalar_select %p335, %s336, %s337
      %p341 = pneg %p335
      %p342 = scmp.eq.s32.totalorder %s34, 1
      %p343 = por %p341, %p342
      %p344 = scmp.ne.s32.totalorder %s336, %s339
      %p345 = scmp.eq.s32.totalorder %s34, 0
      %p346 = por %p344, %p345
      %p347 = scmp.ne.s32.totalorder %s336, %s339
      %p348 = scmp.eq.s32.totalorder %s39, 1
      %p349 = por %p347, %p348
      %p350 = scmp.ne.s32.totalorder %s339, %s340
      %p351 = scmp.eq.s32.totalorder %s39, 0
      %p352 = por %p350, %p351
      %p353 = scmp.ne.s32.totalorder %s339, %s340
      %p354 = scmp.eq.s32.totalorder %s40, 1
      %p355 = por %p353, %p354
      %p357 = scmp.ne.s32.totalorder %s340, %s356
      %p358 = scmp.eq.s32.totalorder %s40, 0
      %p359 = por %p357, %p358
      %s360 = ssub.s32 %s41, %s53
      %s361 = ssub.s32 %s42, %s49
      %s362 = sor.u32 %s360, %s361
      %p363 = scmp.eq.s32.totalorder %s362, 0
      %s365 = sadd.s32 %s364, 1
      %s366 = scalar_select %p363, %s364, %s365
      %p369 = pneg %p363
      %p370 = scmp.eq.s32.totalorder %s34, 1
      %p371 = por %p369, %p370
      %p372 = scmp.ne.s32.totalorder %s364, %s367
      %p373 = scmp.eq.s32.totalorder %s34, 0
      %p374 = por %p372, %p373
      %p375 = scmp.ne.s32.totalorder %s364, %s367
      %p376 = scmp.eq.s32.totalorder %s39, 1
      %p377 = por %p375, %p376
      %p378 = scmp.ne.s32.totalorder %s367, %s368
      %p379 = scmp.eq.s32.totalorder %s39, 0
      %p380 = por %p378, %p379
      %p381 = scmp.ne.s32.totalorder %s367, %s368
      %p382 = scmp.eq.s32.totalorder %s40, 1
      %p383 = por %p381, %p382
      %p385 = scmp.ne.s32.totalorder %s368, %s384
      %p386 = scmp.eq.s32.totalorder %s40, 0
      %p387 = por %p385, %p386
      %p388 = scmp.le.s32.totalorder 1, %s34
      %p389 = scmp.lt.s32.totalorder %s34, 3
      %p390 = pnand %p388, %p389
      %p391 = pneg %p390
      // Predicated region
      $region9: #{tpu_custom_call.1} parent=5 // pred_check
        _
      $region10: #{tpu_custom_call.1} parent=5 // pred_check_branch
        %393 = sbr.rel (%p390) target = $region12
      $region11: #{tpu_custom_call.1} parent=5 // pred_region
        %s394 = ssub.s32 %s34, 1
        // Predicated region
        $region13: #{tpu_custom_call.1} parent=11 // pred_check
          %p395 = pneg %p177
        $region14: #{tpu_custom_call.1} parent=11 // pred_check_branch
          %397 = sbr.rel (%p395) target = $region16
        $region15: #{tpu_custom_call.1} parent=11 // pred_region
          %s399 = ssub.s32 256, 256
          %400 = vsyncadd [#allocation6], %s399
          %s401 = sshll.u32 [#allocation7], 4
          %s402 = int_to_ptr.vmem [resolvable:$true] %s401
          %407 = dma.hbm_to_vmem [thread:$0]  %s4, 256, %s402, [#allocation6], 64, 64, 4
        $region16: #{tpu_custom_call.1} parent=11 // pred_fallthru
          _
        // Predicated region
        $region17: #{tpu_custom_call.1} parent=11 // pred_check
          %p408 = pneg %p198
        $region18: #{tpu_custom_call.1} parent=11 // pred_check_branch
          %410 = sbr.rel (%p408) target = $region20
        $region19: #{tpu_custom_call.1} parent=11 // pred_region
          %s412 = ssub.s32 16, 16
          %413 = vsyncadd [#allocation9], %s412
          %s415 = sshll.u32 [#allocation8], 4
          %s416 = int_to_ptr.vmem [resolvable:$true] %s415
          %418 = dma.hbm_to_vmem [thread:$0]  %s5, 16, %s416, [#allocation9]
        $region20: #{tpu_custom_call.1} parent=11 // pred_fallthru
          _
        // Predicated region
        $region21: #{tpu_custom_call.1} parent=11 // pred_check
          %p419 = pneg %p219
        $region22: #{tpu_custom_call.1} parent=11 // pred_check_branch
          %421 = sbr.rel (%p419) target = $region24
        $region23: #{tpu_custom_call.1} parent=11 // pred_region
          %s423 = ssub.s32 256, 256
          %424 = vsyncadd [#allocation9], %s423
          %s425 = sshll.u32 [#allocation10], 4
          %s426 = int_to_ptr.vmem [resolvable:$true] %s425
          %431 = dma.hbm_to_vmem [thread:$0]  %s6, 256, %s426, [#allocation9], 64, 64, 4
        $region24: #{tpu_custom_call.1} parent=11 // pred_fallthru
          _
        // Predicated region
        $region25: #{tpu_custom_call.1} parent=11 // pred_check
          %p432 = pneg %p240
        $region26: #{tpu_custom_call.1} parent=11 // pred_check_branch
          %434 = sbr.rel (%p432) target = $region28
        $region27: #{tpu_custom_call.1} parent=11 // pred_region
          %s436 = ssub.s32 16, 16
          %437 = vsyncadd [#allocation12], %s436
          %s439 = sshll.u32 [#allocation11], 4
          %s440 = int_to_ptr.vmem [resolvable:$true] %s439
          %442 = dma.hbm_to_vmem [thread:$0]  %s7, 16, %s440, [#allocation12]
        $region28: #{tpu_custom_call.1} parent=11 // pred_fallthru
          _
        // Predicated region
        $region29: #{tpu_custom_call.1} parent=11 // pred_check
          %p443 = pneg %p261
        $region30: #{tpu_custom_call.1} parent=11 // pred_check_branch
          %445 = sbr.rel (%p443) target = $region32
        $region31: #{tpu_custom_call.1} parent=11 // pred_region
          _
        $region32: #{tpu_custom_call.1} parent=11 // pred_fallthru
          _
        // Predicated region
        $region33: #{tpu_custom_call.1} parent=11 // pred_check
          %p446 = pneg %p282
        $region34: #{tpu_custom_call.1} parent=11 // pred_check_branch
          %448 = sbr.rel (%p446) target = $region36
        $region35: #{tpu_custom_call.1} parent=11 // pred_region
          _
        $region36: #{tpu_custom_call.1} parent=11 // pred_fallthru
          _
        // Predicated region
        $region37: #{tpu_custom_call.1} parent=11 // pred_check
          %p449 = pneg %p303
        $region38: #{tpu_custom_call.1} parent=11 // pred_check_branch
          %451 = sbr.rel (%p449) target = $region40
        $region39: #{tpu_custom_call.1} parent=11 // pred_region
          _
        $region40: #{tpu_custom_call.1} parent=11 // pred_fallthru
          _
        // Predicated region
        $region41: #{tpu_custom_call.1} parent=11 // pred_check
          %p452 = pneg %p324
        $region42: #{tpu_custom_call.1} parent=11 // pred_check_branch
          %454 = sbr.rel (%p452) target = $region44
        $region43: #{tpu_custom_call.1} parent=11 // pred_region
          _
        $region44: #{tpu_custom_call.1} parent=11 // pred_fallthru
          _
      $region12: #{tpu_custom_call.1} parent=5 // pred_fallthru
        _
      %p455 = scmp.lt.s32.totalorder %s34, 2
      // Predicated region
      $region45: #{tpu_custom_call.1} parent=5 // pred_check
        %p456 = pneg %p455
      $region46: #{tpu_custom_call.1} parent=5 // pred_check_branch
        %458 = sbr.rel (%p456) target = $region48
      $region47: #{tpu_custom_call.1} parent=5 // pred_region
        // Predicated region
        $region49: #{tpu_custom_call.1} parent=47 // pred_check
          %p459 = pneg %p68
        $region50: #{tpu_custom_call.1} parent=47 // pred_check_branch
          %461 = sbr.rel (%p459) target = $region52
        $region51: #{tpu_custom_call.1} parent=47 // pred_region
          %p462 = scmp.lt.s32.totalorder %s41, 1
          %s463 = scalar_select %p462, %s41, 1
          %p464 = scmp.lt.s32.totalorder %s42, 0
          %s465 = scalar_select %p464, %s42, 0
          %s466 = sadd.s32 %s465, %s463
          %s467 = smul.addr %s466, 8
          %s468 = scalar_lea.vmem %s0, %s467
        $region52: #{tpu_custom_call.1} parent=47 // pred_fallthru
          _
        // Predicated region
        $region53: #{tpu_custom_call.1} parent=47 // pred_check
          %p469 = pneg %p94
        $region54: #{tpu_custom_call.1} parent=47 // pred_check_branch
          %471 = sbr.rel (%p469) target = $region56
        $region55: #{tpu_custom_call.1} parent=47 // pred_region
          %s472 = sand.u32 %s84, 1
          %s473 = scalar_lea.sflag [#allocation3], %s472
          %s474 = sand.u32 %s84, 1
          %s475 = smul.addr %s474, 8
          %s476 = scalar_lea.vmem [#allocation2], %s475
          %s478 = ssub.s32 128, 128
          %479 = vsyncadd %s473, %s478
          %s480 = smul.addr %s41, 128
          %s481 = scalar_lea.hbm %s1, %s480
          %s483 = sshll.u32 %s476, 4
          %s484 = int_to_ptr.vmem [resolvable:$true] %s483
          %486 = dma.hbm_to_vmem [thread:$0]  %s481, 128, %s484, %s473
        $region56: #{tpu_custom_call.1} parent=47 // pred_fallthru
          _
        // Predicated region
        $region57: #{tpu_custom_call.1} parent=47 // pred_check
          %p487 = pneg %p122
        $region58: #{tpu_custom_call.1} parent=47 // pred_check_branch
          %489 = sbr.rel (%p487) target = $region60
        $region59: #{tpu_custom_call.1} parent=47 // pred_region
          %s490 = sand.u32 %s34, 1
          %s491 = scalar_lea.sflag [#allocation6], %s490
          %s492 = sand.u32 %s112, 1
          %s493 = smul.addr %s492, 2
          %s494 = scalar_lea.vmem [#allocation5], %s493
          %s496 = ssub.s32 32, 32
          %497 = vsyncadd %s491, %s496
          %s498 = sadd.s32 %s42, %s41
          %s499 = smul.addr %s498, 32
          %s500 = scalar_lea.hbm %s2, %s499
          %s502 = sshll.u32 %s494, 4
          %s503 = int_to_ptr.vmem [resolvable:$true] %s502
          %505 = dma.hbm_to_vmem [thread:$0]  %s500, 32, %s503, %s491
        $region60: #{tpu_custom_call.1} parent=47 // pred_fallthru
          _
        // Predicated region
        $region61: #{tpu_custom_call.1} parent=47 // pred_check
          %p506 = pneg %p150
        $region62: #{tpu_custom_call.1} parent=47 // pred_check_branch
          %508 = sbr.rel (%p506) target = $region64
        $region63: #{tpu_custom_call.1} parent=47 // pred_region
          %p509 = scmp.lt.s32.totalorder %s41, 1
          %s510 = scalar_select %p509, %s41, 1
          %p511 = scmp.lt.s32.totalorder %s42, 0
          %s512 = scalar_select %p511, %s42, 0
          %s513 = sadd.s32 %s512, %s510
          %s514 = smul.addr %s513, 8
          %s515 = scalar_lea.vmem %s3, %s514
        $region64: #{tpu_custom_call.1} parent=47 // pred_fallthru
          _
      $region48: #{tpu_custom_call.1} parent=5 // pred_fallthru
        _
      %p516 = scmp.le.s32.totalorder 1, %s34
      %p517 = scmp.lt.s32.totalorder %s34, 3
      %p518 = pnand %p516, %p517
      %p519 = pneg %p518
      // Predicated region
      $region65: #{tpu_custom_call.1} parent=5 // pred_check
        _
      $region66: #{tpu_custom_call.1} parent=5 // pred_check_branch
        %521 = sbr.rel (%p518) target = $region68
      $region67: #{tpu_custom_call.1} parent=5 // pred_region
        %s522 = ssub.s32 %s34, 1
        %s523 = sand.u32 %s87, 1
        %s524 = scalar_lea.sflag [#allocation3], %s523
        %s525 = sand.u32 %s87, 1
        %s526 = smul.addr %s525, 8
        %s527 = scalar_lea.vmem [#allocation2], %s526
        // Predicated region
        $region69: #{tpu_custom_call.1} parent=67 // pred_check
          %p528 = pneg %p100
        $region70: #{tpu_custom_call.1} parent=67 // pred_check_branch
          %530 = sbr.rel (%p528) target = $region72
        $region71: #{tpu_custom_call.1} parent=67 // pred_region
          %531 = dma.done %s524, 128
        $region72: #{tpu_custom_call.1} parent=67 // pred_fallthru
          _
        %s532 = sand.u32 %s39, 1
        %s533 = scalar_lea.sflag [#allocation6], %s532
        %s534 = sand.u32 %s115, 1
        %s535 = smul.addr %s534, 2
        %s536 = scalar_lea.vmem [#allocation5], %s535
        // Predicated region
        $region73: #{tpu_custom_call.1} parent=67 // pred_check
          %p537 = pneg %p128
        $region74: #{tpu_custom_call.1} parent=67 // pred_check_branch
          %539 = sbr.rel (%p537) target = $region76
        $region75: #{tpu_custom_call.1} parent=67 // pred_region
          %540 = dma.done %s533, 32
        $region76: #{tpu_custom_call.1} parent=67 // pred_fallthru
          _
        // Predicated region
        $region77: #{tpu_custom_call.1} parent=67 // pred_check
          %p541 = pneg %p177
        $region78: #{tpu_custom_call.1} parent=67 // pred_check_branch
          %543 = sbr.rel (%p541) target = $region80
        $region79: #{tpu_custom_call.1} parent=67 // pred_region
          %544 = dma.done [#allocation6], 256
        $region80: #{tpu_custom_call.1} parent=67 // pred_fallthru
          _
        // Predicated region
        $region81: #{tpu_custom_call.1} parent=67 // pred_check
          %p545 = pneg %p198
        $region82: #{tpu_custom_call.1} parent=67 // pred_check_branch
          %547 = sbr.rel (%p545) target = $region84
        $region83: #{tpu_custom_call.1} parent=67 // pred_region
          %548 = dma.done [#allocation9], 16
        $region84: #{tpu_custom_call.1} parent=67 // pred_fallthru
          _
        // Predicated region
        $region85: #{tpu_custom_call.1} parent=67 // pred_check
          %p549 = pneg %p219
        $region86: #{tpu_custom_call.1} parent=67 // pred_check_branch
          %551 = sbr.rel (%p549) target = $region88
        $region87: #{tpu_custom_call.1} parent=67 // pred_region
          %552 = dma.done [#allocation9], 256
        $region88: #{tpu_custom_call.1} parent=67 // pred_fallthru
          _
        // Predicated region
        $region89: #{tpu_custom_call.1} parent=67 // pred_check
          %p553 = pneg %p240
        $region90: #{tpu_custom_call.1} parent=67 // pred_check_branch
          %555 = sbr.rel (%p553) target = $region92
        $region91: #{tpu_custom_call.1} parent=67 // pred_region
          %556 = dma.done [#allocation12], 16
        $region92: #{tpu_custom_call.1} parent=67 // pred_fallthru
          _
        %p557 = scmp.lt.s32.totalorder %s43, 1
        %s558 = scalar_select %p557, %s43, 1
        %p559 = scmp.lt.s32.totalorder %s44, 0
        %s560 = scalar_select %p559, %s44, 0
        %s561 = sadd.s32 %s560, %s558
        %s562 = smul.addr %s561, 8
        %s563 = scalar_lea.vmem %s0, %s562
        %p564 = pneg %p74
        %p565 = pneg %p71
        %s566 = sand.u32 %s87, 1
        %s567 = scalar_lea.sflag [#allocation3], %s566
        %s568 = sand.u32 %s87, 1
        %s569 = smul.addr %s568, 8
        %s570 = scalar_lea.vmem [#allocation2], %s569
        %p571 = pneg %p100
        %p572 = pneg %p97
        %s573 = sand.u32 %s39, 1
        %s574 = scalar_lea.sflag [#allocation6], %s573
        %s575 = sand.u32 %s115, 1
        %s576 = smul.addr %s575, 2
        %s577 = scalar_lea.vmem [#allocation5], %s576
        %p578 = pneg %p128
        %p579 = pneg %p125
        %p580 = scmp.lt.s32.totalorder %s43, 1
        %s581 = scalar_select %p580, %s43, 1
        %p582 = scmp.lt.s32.totalorder %s44, 0
        %s583 = scalar_select %p582, %s44, 0
        %s584 = sadd.s32 %s583, %s581
        %s585 = smul.addr %s584, 8
        %s586 = scalar_lea.vmem %s3, %s585
        %p587 = pneg %p156
        %p588 = pneg %p153
        %p589 = pneg %p177
        %p590 = pneg %p174
        %p591 = pneg %p198
        %p592 = pneg %p195
        %p593 = pneg %p219
        %p594 = pneg %p216
        %p595 = pneg %p240
        %p596 = pneg %p237
        %p597 = pneg %p261
        %p598 = pneg %p258
        %p599 = pneg %p282
        %p600 = pneg %p279
        %p601 = pneg %p303
        %p602 = pneg %p300
        %p603 = pneg %p324
        %p604 = pneg %p321
        %p605 = pneg %p352
        %p606 = pneg %p349
        %s607 = sand.u32 %s339, 1
        %s608 = scalar_lea.sflag [#allocation4], %s607
        %s609 = sand.u32 %s339, 1
        %s610 = smul.addr %s609, 4
        %s611 = scalar_lea.vmem [#allocation13], %s610
        %p612 = pneg %p380
        %p613 = pneg %p377
        %s614 = sand.u32 %s367, 1
        %s615 = scalar_lea.sflag [#allocation15], %s614
        %s616 = sand.u32 %s367, 1
        %s617 = smul.addr %s616, 8
        %s618 = scalar_lea.vmem [#allocation14], %s617
        %p619 = scmp.lt.s32.totalorder %s43, 1
        %s620 = scalar_select %p619, %s43, 1
        %p621 = scmp.lt.s32.totalorder %s44, 0
        %s622 = scalar_select %p621, %s44, 0
        %s623 = sadd.s32 %s622, %s620
        %s624 = smul.addr %s623, 8
        %s625 = scalar_lea.vmem %s0, %s624
        %p626 = scmp.lt.s32.totalorder %s43, 1
        %s627 = scalar_select %p626, %s43, 1
        %p628 = scmp.lt.s32.totalorder %s44, 0
        %s629 = scalar_select %p628, %s44, 0
        %s630 = sadd.s32 %s629, %s627
        %s631 = smul.addr %s630, 8
        %s632 = scalar_lea.vmem %s3, %s631
        %v634 = vld [vmem:[%s625] sm:$0xff]
        %v635 = vpack.c.bf16 %v634, %v634
        %v636 = vld [vmem:[%s527] sm:$0xff]
        %v637 = vpack.c.bf16 %v636, %v636
        %v638 = vld [vmem:[#allocation7] sm:$0xf]
        %v639 = vld [vmem:[#allocation7 + $0x4] sm:$0xf]
        %v640 = vld [vmem:[#allocation7 + $0x8] sm:$0xf]
        %v641 = vld [vmem:[#allocation7 + $0xc] sm:$0xf]
        %v642 = vld [vmem:[#allocation8] sm:$0x1]
        %v644 = vlaneseq
        %v645 = vshrl.u32 %v644, 7
        %v646 = vsub.s32 0, %v645
        %v647 = vrot.slane %v642, %v646
        %v653 = vunpack.c.l.b16 %v638
        %v654 = vunpack.c.l.b16 %v639
        %v655 = vunpack.c.l.b16 %v640
        %v656 = vunpack.c.l.b16 %v641
        %v657 = vpack.c.b16 %v654, %v653
        %v658 = vpack.c.b16 %v656, %v655
        %vm661 = vcmask 261120
        %v663 = vsel %vm661, %v635, 0
        %665 = vmatprep.subr.bf16.mxu0 0
        %666 = vmatpush1.bf16.msra.mxu0 0
        %667 = vmatprep.subr.bf16.mxu0 0
        %668 = vmatpush1.bf16.msra.mxu0 0
        %669 = vmatprep.subr.bf16.mxu0 0
        %670 = vmatpush1.bf16.msra.mxu0 0
        %671 = vmatprep.subr.bf16.mxu0 0
        %672 = vmatpush1.bf16.msra.mxu0 0
        %673 = vmatprep.subr.bf16.mxu0 0
        %674 = vmatpush1.bf16.msra.mxu0 0
        %675 = vmatprep.subr.bf16.mxu0 0
        %676 = vmatpush1.bf16.msra.mxu0 0
        %677 = vmatprep.subr.bf16.mxu0 0
        %678 = vmatpush1.bf16.msra.mxu0 %v658
        %679 = vmatprep.subr.bf16.mxu0 0
        %680 = vmatpush1.bf16.msra.mxu0 %v657
        %681 = vmatprep.subr.bf16.mxu0 0
        %682 = vmatpush2.bf16.msra.mxu0 0
        %683 = vmatprep.subr.bf16.mxu0 0
        %684 = vmatpush2.bf16.msra.mxu0 0
        %685 = vmatprep.subr.bf16.mxu0 0
        %686 = vmatpush2.bf16.msra.mxu0 0
        %687 = vmatprep.subr.bf16.mxu0 0
        %688 = vmatpush2.bf16.msra.mxu0 0
        %689 = vmatprep.subr.bf16.mxu0 0
        %690 = vmatpush2.bf16.msra.mxu0 0
        %691 = vmatprep.subr.bf16.mxu0 0
        %692 = vmatpush2.bf16.msra.mxu0 0
        %693 = vmatprep.subr.bf16.mxu0 0
        %694 = vmatpush2.bf16.msra.mxu0 0
        %695 = vmatprep.subr.bf16.mxu0 0
        %696 = vmatpush2.bf16.msra.mxu0 0
        %697 = vmatprep.mubr.bf16.mxu0 0
        %698 = vmatmul.mubr.bf16.gmra.mxu0 %v663
        %v699 = vpop.f32.mrf.mxu0
        %v700 = vadd.f32 %v647, %v699
        %v701 = vpop.f32.mrf.mxu0
        %v702 = vpop.f32.mrf.mxu0
        %v703 = vpop.f32.mrf.mxu0
        %704 = vdwg.mxu0
        %v705 = vmul.f32 %v700, 0.125
        %v706 = vld [vmem:[#allocation10] sm:$0xf]
        %v707 = vld [vmem:[#allocation10 + $0x4] sm:$0xf]
        %v708 = vld [vmem:[#allocation10 + $0x8] sm:$0xf]
        %v709 = vld [vmem:[#allocation10 + $0xc] sm:$0xf]
        %v710 = vld [vmem:[#allocation11] sm:$0x1]
        %v712 = vlaneseq
        %v713 = vshrl.u32 %v712, 7
        %v714 = vsub.s32 0, %v713
        %v715 = vrot.slane %v710, %v714
        %v721 = vunpack.c.l.b16 %v706
        %v722 = vunpack.c.l.b16 %v707
        %v723 = vunpack.c.l.b16 %v708
        %v724 = vunpack.c.l.b16 %v709
        %v725 = vpack.c.b16 %v722, %v721
        %v726 = vpack.c.b16 %v724, %v723
        %v730 = vsel %vm661, %v637, 0
        %732 = vmatprep.subr.bf16.mxu0 0
        %733 = vmatpush1.bf16.msra.mxu0 0
        %734 = vmatprep.subr.bf16.mxu0 0
        %735 = vmatpush1.bf16.msra.mxu0 0
        %736 = vmatprep.subr.bf16.mxu0 0
        %737 = vmatpush1.bf16.msra.mxu0 0
        %738 = vmatprep.subr.bf16.mxu0 0
        %739 = vmatpush1.bf16.msra.mxu0 0
        %740 = vmatprep.subr.bf16.mxu0 0
        %741 = vmatpush1.bf16.msra.mxu0 0
        %742 = vmatprep.subr.bf16.mxu0 0
        %743 = vmatpush1.bf16.msra.mxu0 0
        %744 = vmatprep.subr.bf16.mxu0 0
        %745 = vmatpush1.bf16.msra.mxu0 %v726
        %746 = vmatprep.subr.bf16.mxu0 0
        %747 = vmatpush1.bf16.msra.mxu0 %v725
        %748 = vmatprep.subr.bf16.mxu0 0
        %749 = vmatpush2.bf16.msra.mxu0 0
        %750 = vmatprep.subr.bf16.mxu0 0
        %751 = vmatpush2.bf16.msra.mxu0 0
        %752 = vmatprep.subr.bf16.mxu0 0
        %753 = vmatpush2.bf16.msra.mxu0 0
        %754 = vmatprep.subr.bf16.mxu0 0
        %755 = vmatpush2.bf16.msra.mxu0 0
        %756 = vmatprep.subr.bf16.mxu0 0
        %757 = vmatpush2.bf16.msra.mxu0 0
        %758 = vmatprep.subr.bf16.mxu0 0
        %759 = vmatpush2.bf16.msra.mxu0 0
        %760 = vmatprep.subr.bf16.mxu0 0
        %761 = vmatpush2.bf16.msra.mxu0 0
        %762 = vmatprep.subr.bf16.mxu0 0
        %763 = vmatpush2.bf16.msra.mxu0 0
        %764 = vmatprep.mubr.bf16.mxu0 0
        %765 = vmatmul.mubr.bf16.gmra.mxu0 %v730
        %v766 = vpop.f32.mrf.mxu0
        %v767 = vadd.f32 %v715, %v766
        %v768 = vpop.f32.mrf.mxu0
        %v769 = vpop.f32.mrf.mxu0
        %v770 = vpop.f32.mrf.mxu0
        %771 = vdwg.mxu0
        %773 = vrot.lane.b32.xlu0 %v705, 112
        %v774 = vpop.permute.xlu0 %773
        %v776 = vcombine.high %v705, 0.0
        %v778 = vunpack.c.l.s4 1983009808
        %v779 = vunpack.c.0.s8 %v778
        %v780 = vlaneseq
        %v781 = vshrl.u32 %v780, 7
        %v782 = vsub.s32 %v779, %v781
        %v783 = vrot.slane %v705, %v782
        %v785 = vunpack.c.l.s4 1983009808
        %v786 = vunpack.c.0.s8 %v785
        %v787 = vlaneseq
        %v788 = vshrl.u32 %v787, 7
        %v789 = vsub.s32 %v786, %v788
        %v790 = vrot.slane %v776, %v789
        %v791 = vcombine.high %v774, 0.0
        %v793 = vunpack.c.l.s4 1983009808
        %v794 = vunpack.c.0.s8 %v793
        %v795 = vlaneseq
        %v796 = vshrl.u32 %v795, 7
        %v797 = vsub.s32 %v794, %v796
        %v798 = vrot.slane %v774, %v797
        %v800 = vunpack.c.l.s4 1983009808
        %v801 = vunpack.c.0.s8 %v800
        %v802 = vlaneseq
        %v803 = vshrl.u32 %v802, 7
        %v804 = vsub.s32 %v801, %v803
        %v805 = vrot.slane %v791, %v804
        %v806 = vcombine.low %v783, %v798
        %v807 = vcombine.high %v783, %v798
        %v809 = vunpack.c.l.s4 1934713408
        %v810 = vunpack.c.0.s8 %v809
        %v811 = vlaneseq
        %v812 = vshrl.u32 %v811, 7
        %v813 = vsub.s32 %v810, %v812
        %v814 = vrot.slane %v806, %v813
        %v816 = vunpack.c.l.s4 1934713408
        %v817 = vunpack.c.0.s8 %v816
        %v818 = vlaneseq
        %v819 = vshrl.u32 %v818, 7
        %v820 = vsub.s32 %v817, %v819
        %v821 = vrot.slane %v807, %v820
        %v822 = vcombine.low %v790, %v805
        %v823 = vcombine.high %v790, %v805
        %v825 = vunpack.c.l.s4 1934713408
        %v826 = vunpack.c.0.s8 %v825
        %v827 = vlaneseq
        %v828 = vshrl.u32 %v827, 7
        %v829 = vsub.s32 %v826, %v828
        %v830 = vrot.slane %v822, %v829
        %v832 = vunpack.c.l.s4 1934713408
        %v833 = vunpack.c.0.s8 %v832
        %v834 = vlaneseq
        %v835 = vshrl.u32 %v834, 7
        %v836 = vsub.s32 %v833, %v835
        %v837 = vrot.slane %v823, %v836
        %v838 = vcombine.high %v814, 0.0
        %v839 = vcombine.high %v821, 0.0
        %v840 = vcombine.high %v830, 0.0
        %v841 = vcombine.high %v837, 0.0
        %v842 = vcombine.low %v814, %v821
        %v844 = vunpack.c.l.s4 1983009808
        %v845 = vunpack.c.0.s8 %v844
        %v846 = vlaneseq
        %v847 = vshrl.u32 %v846, 7
        %v848 = vsub.s32 %v845, %v847
        %v849 = vrot.slane %v842, %v848
        %v850 = vcombine.low %v838, %v839
        %v852 = vunpack.c.l.s4 1983009808
        %v853 = vunpack.c.0.s8 %v852
        %v854 = vlaneseq
        %v855 = vshrl.u32 %v854, 7
        %v856 = vsub.s32 %v853, %v855
        %v857 = vrot.slane %v850, %v856
        %v858 = vcombine.low %v830, %v837
        %v860 = vunpack.c.l.s4 1983009808
        %v861 = vunpack.c.0.s8 %v860
        %v862 = vlaneseq
        %v863 = vshrl.u32 %v862, 7
        %v864 = vsub.s32 %v861, %v863
        %v865 = vrot.slane %v858, %v864
        %v866 = vcombine.low %v840, %v841
        %v868 = vunpack.c.l.s4 1983009808
        %v869 = vunpack.c.0.s8 %v868
        %v870 = vlaneseq
        %v871 = vshrl.u32 %v870, 7
        %v872 = vsub.s32 %v869, %v871
        %v873 = vrot.slane %v866, %v872
        %v874 = vcombine.low %v849, %v857
        %v876 = vunpack.c.l.s4 1934713408
        %v877 = vunpack.c.0.s8 %v876
        %v878 = vlaneseq
        %v879 = vshrl.u32 %v878, 7
        %v880 = vsub.s32 %v877, %v879
        %v881 = vrot.slane %v874, %v880
        %v882 = vcombine.low %v865, %v873
        %v884 = vunpack.c.l.s4 1934713408
        %v885 = vunpack.c.0.s8 %v884
        %v886 = vlaneseq
        %v887 = vshrl.u32 %v886, 7
        %v888 = vsub.s32 %v885, %v887
        %v889 = vrot.slane %v882, %v888
        %v890 = vcombine.low %v881, %v889
        %v891 = vcombine.high %v881, %v889
        %v892 = vpack.c.bf16 %v890, %v890
        %v893 = vpack.c.bf16 %v891, %v891
        %895 = vrot.lane.b32.xlu0 %v767, 112
        %v896 = vpop.permute.xlu0 %895
        %v898 = vcombine.high %v767, 0.0
        %v900 = vunpack.c.l.s4 1983009808
        %v901 = vunpack.c.0.s8 %v900
        %v902 = vlaneseq
        %v903 = vshrl.u32 %v902, 7
        %v904 = vsub.s32 %v901, %v903
        %v905 = vrot.slane %v767, %v904
        %v907 = vunpack.c.l.s4 1983009808
        %v908 = vunpack.c.0.s8 %v907
        %v909 = vlaneseq
        %v910 = vshrl.u32 %v909, 7
        %v911 = vsub.s32 %v908, %v910
        %v912 = vrot.slane %v898, %v911
        %v913 = vcombine.high %v896, 0.0
        %v915 = vunpack.c.l.s4 1983009808
        %v916 = vunpack.c.0.s8 %v915
        %v917 = vlaneseq
        %v918 = vshrl.u32 %v917, 7
        %v919 = vsub.s32 %v916, %v918
        %v920 = vrot.slane %v896, %v919
        %v922 = vunpack.c.l.s4 1983009808
        %v923 = vunpack.c.0.s8 %v922
        %v924 = vlaneseq
        %v925 = vshrl.u32 %v924, 7
        %v926 = vsub.s32 %v923, %v925
        %v927 = vrot.slane %v913, %v926
        %v928 = vcombine.low %v905, %v920
        %v929 = vcombine.high %v905, %v920
        %v931 = vunpack.c.l.s4 1934713408
        %v932 = vunpack.c.0.s8 %v931
        %v933 = vlaneseq
        %v934 = vshrl.u32 %v933, 7
        %v935 = vsub.s32 %v932, %v934
        %v936 = vrot.slane %v928, %v935
        %v938 = vunpack.c.l.s4 1934713408
        %v939 = vunpack.c.0.s8 %v938
        %v940 = vlaneseq
        %v941 = vshrl.u32 %v940, 7
        %v942 = vsub.s32 %v939, %v941
        %v943 = vrot.slane %v929, %v942
        %v944 = vcombine.low %v912, %v927
        %v945 = vcombine.high %v912, %v927
        %v947 = vunpack.c.l.s4 1934713408
        %v948 = vunpack.c.0.s8 %v947
        %v949 = vlaneseq
        %v950 = vshrl.u32 %v949, 7
        %v951 = vsub.s32 %v948, %v950
        %v952 = vrot.slane %v944, %v951
        %v954 = vunpack.c.l.s4 1934713408
        %v955 = vunpack.c.0.s8 %v954
        %v956 = vlaneseq
        %v957 = vshrl.u32 %v956, 7
        %v958 = vsub.s32 %v955, %v957
        %v959 = vrot.slane %v945, %v958
        %v960 = vcombine.high %v936, 0.0
        %v961 = vcombine.high %v943, 0.0
        %v962 = vcombine.high %v952, 0.0
        %v963 = vcombine.high %v959, 0.0
        %v964 = vcombine.low %v936, %v943
        %v966 = vunpack.c.l.s4 1983009808
        %v967 = vunpack.c.0.s8 %v966
        %v968 = vlaneseq
        %v969 = vshrl.u32 %v968, 7
        %v970 = vsub.s32 %v967, %v969
        %v971 = vrot.slane %v964, %v970
        %v972 = vcombine.low %v960, %v961
        %v974 = vunpack.c.l.s4 1983009808
        %v975 = vunpack.c.0.s8 %v974
        %v976 = vlaneseq
        %v977 = vshrl.u32 %v976, 7
        %v978 = vsub.s32 %v975, %v977
        %v979 = vrot.slane %v972, %v978
        %v980 = vcombine.low %v952, %v959
        %v982 = vunpack.c.l.s4 1983009808
        %v983 = vunpack.c.0.s8 %v982
        %v984 = vlaneseq
        %v985 = vshrl.u32 %v984, 7
        %v986 = vsub.s32 %v983, %v985
        %v987 = vrot.slane %v980, %v986
        %v988 = vcombine.low %v962, %v963
        %v990 = vunpack.c.l.s4 1983009808
        %v991 = vunpack.c.0.s8 %v990
        %v992 = vlaneseq
        %v993 = vshrl.u32 %v992, 7
        %v994 = vsub.s32 %v991, %v993
        %v995 = vrot.slane %v988, %v994
        %v996 = vcombine.low %v971, %v979
        %v998 = vunpack.c.l.s4 1934713408
        %v999 = vunpack.c.0.s8 %v998
        %v1000 = vlaneseq
        %v1001 = vshrl.u32 %v1000, 7
        %v1002 = vsub.s32 %v999, %v1001
        %v1003 = vrot.slane %v996, %v1002
        %v1004 = vcombine.low %v987, %v995
        %v1006 = vunpack.c.l.s4 1934713408
        %v1007 = vunpack.c.0.s8 %v1006
        %v1008 = vlaneseq
        %v1009 = vshrl.u32 %v1008, 7
        %v1010 = vsub.s32 %v1007, %v1009
        %v1011 = vrot.slane %v1004, %v1010
        %v1012 = vcombine.low %v1003, %v1011
        %v1013 = vcombine.high %v1003, %v1011
        %v1014 = vpack.c.bf16 %v1012, %v1012
        %v1015 = vpack.c.bf16 %v1013, %v1013
        %v1016 = vld [vmem:[%s536] sm:$0x3]
        %v1017 = vunpack.c.0.s8 %v1016
        %v1018 = vcvt.s32.f32 %v1017
        %v1019 = vmul.f32 %v1018, -1e+30
        %vm1020 = vcmask 130048
        %v1022 = vsel %vm1020, %v892, 0
        %v1025 = vsel %vm1020, %v1014, 0
        %1027 = vmatprep.subr.bf16.mxu0 0
        %1028 = vmatpush1.bf16.xpose.msra.mxu0 0
        %1029 = vmatprep.subr.bf16.mxu0 0
        %1030 = vmatpush1.bf16.xpose.msra.mxu0 0
        %1031 = vmatprep.subr.bf16.mxu0 0
        %1032 = vmatpush1.bf16.xpose.msra.mxu0 0
        %1033 = vmatprep.subr.bf16.mxu0 0
        %1034 = vmatpush1.bf16.xpose.msra.mxu0 0
        %1035 = vmatprep.subr.bf16.mxu0 0
        %1036 = vmatpush1.bf16.xpose.msra.mxu0 0
        %1037 = vmatprep.subr.bf16.mxu0 0
        %1038 = vmatpush1.bf16.xpose.msra.mxu0 0
        %1039 = vmatprep.subr.bf16.mxu0 0
        %1040 = vmatpush1.bf16.xpose.msra.mxu0 0
        %1041 = vmatprep.subr.bf16.mxu0 0
        %1042 = vmatpush1.bf16.xpose.msra.mxu0 %v1025
        %1043 = vmatprep.subr.bf16.mxu0 0
        %1044 = vmatpush2.bf16.xpose.msra.mxu0 0
        %1045 = vmatprep.subr.bf16.mxu0 0
        %1046 = vmatpush2.bf16.xpose.msra.mxu0 0
        %1047 = vmatprep.subr.bf16.mxu0 0
        %1048 = vmatpush2.bf16.xpose.msra.mxu0 0
        %1049 = vmatprep.subr.bf16.mxu0 0
        %1050 = vmatpush2.bf16.xpose.msra.mxu0 0
        %1051 = vmatprep.subr.bf16.mxu0 0
        %1052 = vmatpush2.bf16.xpose.msra.mxu0 0
        %1053 = vmatprep.subr.bf16.mxu0 0
        %1054 = vmatpush2.bf16.xpose.msra.mxu0 0
        %1055 = vmatprep.subr.bf16.mxu0 0
        %1056 = vmatpush2.bf16.xpose.msra.mxu0 0
        %1057 = vmatprep.subr.bf16.mxu0 0
        %1058 = vmatpush2.bf16.xpose.msra.mxu0 0
        %1059 = vmatprep.mubr.bf16.mxu0 0
        %1060 = vmatmul.mubr.bf16.gmra.mxu0 %v1022
        %v1061 = vpop.f32.mrf.mxu0
        %v1062 = vadd.f32 %v1019, %v1061
        %v1063 = vpop.f32.mrf.mxu0
        %v1064 = vpop.f32.mrf.mxu0
        %v1065 = vpop.f32.mrf.mxu0
        %1066 = vdwg.mxu0
        %v1068 = vsel %vm1020, %v893, 0
        %v1071 = vsel %vm1020, %v1015, 0
        %1073 = vmatprep.subr.bf16.mxu0 0
        %1074 = vmatpush1.bf16.xpose.msra.mxu0 0
        %1075 = vmatprep.subr.bf16.mxu0 0
        %1076 = vmatpush1.bf16.xpose.msra.mxu0 0
        %1077 = vmatprep.subr.bf16.mxu0 0
        %1078 = vmatpush1.bf16.xpose.msra.mxu0 0
        %1079 = vmatprep.subr.bf16.mxu0 0
        %1080 = vmatpush1.bf16.xpose.msra.mxu0 0
        %1081 = vmatprep.subr.bf16.mxu0 0
        %1082 = vmatpush1.bf16.xpose.msra.mxu0 0
        %1083 = vmatprep.subr.bf16.mxu0 0
        %1084 = vmatpush1.bf16.xpose.msra.mxu0 0
        %1085 = vmatprep.subr.bf16.mxu0 0
        %1086 = vmatpush1.bf16.xpose.msra.mxu0 0
        %1087 = vmatprep.subr.bf16.mxu0 0
        %1088 = vmatpush1.bf16.xpose.msra.mxu0 %v1071
        %1089 = vmatprep.subr.bf16.mxu0 0
        %1090 = vmatpush2.bf16.xpose.msra.mxu0 0
        %1091 = vmatprep.subr.bf16.mxu0 0
        %1092 = vmatpush2.bf16.xpose.msra.mxu0 0
        %1093 = vmatprep.subr.bf16.mxu0 0
        %1094 = vmatpush2.bf16.xpose.msra.mxu0 0
        %1095 = vmatprep.subr.bf16.mxu0 0
        %1096 = vmatpush2.bf16.xpose.msra.mxu0 0
        %1097 = vmatprep.subr.bf16.mxu0 0
        %1098 = vmatpush2.bf16.xpose.msra.mxu0 0
        %1099 = vmatprep.subr.bf16.mxu0 0
        %1100 = vmatpush2.bf16.xpose.msra.mxu0 0
        %1101 = vmatprep.subr.bf16.mxu0 0
        %1102 = vmatpush2.bf16.xpose.msra.mxu0 0
        %1103 = vmatprep.subr.bf16.mxu0 0
        %1104 = vmatpush2.bf16.xpose.msra.mxu0 0
        %1105 = vmatprep.mubr.bf16.mxu0 0
        %1106 = vmatmul.mubr.bf16.gmra.mxu0 %v1068
        %v1107 = vpop.f32.mrf.mxu0
        %v1108 = vadd.f32 %v1019, %v1107
        %v1109 = vpop.f32.mrf.mxu0
        %v1110 = vpop.f32.mrf.mxu0
        %v1111 = vpop.f32.mrf.mxu0
        %1112 = vdwg.mxu0
        %vm1113 = vcmask 64512
        %v1114 = vsel %vm1113, %v1062, -inf
        %1115 = vmax.xlane.f32.xlu0 %v1114
        %v1116 = vpop.xlane.xlu0 %1115
        %v1117 = vsel %vm1113, %v1108, -inf
        %1118 = vmax.xlane.f32.xlu0 %v1117
        %v1119 = vpop.xlane.xlu0 %1118
        %v1120 = vsub.f32 %v1062, %v1116
        %v1121 = vsub.f32 %v1108, %v1119
        %v1122 = vmul.f32 %v1120, 1.442695
        %v1123 = vpow.pop %v1122
        %v1124 = vmul.f32 %v1121, 1.442695
        %v1125 = vpow.pop %v1124
        %v1126 = vsel %vm1113, %v1123, 0.0
        %1127 = vadd.xlane.f32.xlu0 %v1126
        %v1128 = vpop.xlane.xlu0 %1127
        %v1129 = vsel %vm1113, %v1125, 0.0
        %1130 = vadd.xlane.f32.xlu0 %v1129
        %v1131 = vpop.xlane.xlu0 %1130
        %v1132 = vrcp.pop %v1128
        %v1133 = vmul.f32 %v1123, %v1132
        %v1134 = vrcp.pop %v1131
        %v1135 = vmul.f32 %v1125, %v1134
        %v1136 = vpack.c.bf16 %v1133, %v1133
        %v1137 = vpack.c.bf16 %v1135, %v1135
        %vm1138 = vcmask 60416
        %1139 = vst.msk [vmem:[%s618] sm:$0xf] %vm1138, %v1136
        %1140 = vst.msk [vmem:[%s618 + $0x4] sm:$0xf] %vm1138, %v1137
        %v1142 = vsel %vm1113, %v1136, 0
        %vm1144 = vcmask 1043456
        %v1145 = vsel %vm1144, %v1014, 0
        %1147 = vmatprep.subr.bf16.mxu0 0
        %1148 = vmatpush1.bf16.msra.mxu0 0
        %1149 = vmatprep.subr.bf16.mxu0 0
        %1150 = vmatpush1.bf16.msra.mxu0 0
        %1151 = vmatprep.subr.bf16.mxu0 0
        %1152 = vmatpush1.bf16.msra.mxu0 0
        %1153 = vmatprep.subr.bf16.mxu0 0
        %1154 = vmatpush1.bf16.msra.mxu0 0
        %1155 = vmatprep.subr.bf16.mxu0 0
        %1156 = vmatpush1.bf16.msra.mxu0 0
        %1157 = vmatprep.subr.bf16.mxu0 0
        %1158 = vmatpush1.bf16.msra.mxu0 0
        %1159 = vmatprep.subr.bf16.mxu0 0
        %1160 = vmatpush1.bf16.msra.mxu0 0
        %1161 = vmatprep.subr.bf16.mxu0 0
        %1162 = vmatpush1.bf16.msra.mxu0 %v1145
        %1163 = vmatprep.subr.bf16.mxu0 0
        %1164 = vmatpush2.bf16.msra.mxu0 0
        %1165 = vmatprep.subr.bf16.mxu0 0
        %1166 = vmatpush2.bf16.msra.mxu0 0
        %1167 = vmatprep.subr.bf16.mxu0 0
        %1168 = vmatpush2.bf16.msra.mxu0 0
        %1169 = vmatprep.subr.bf16.mxu0 0
        %1170 = vmatpush2.bf16.msra.mxu0 0
        %1171 = vmatprep.subr.bf16.mxu0 0
        %1172 = vmatpush2.bf16.msra.mxu0 0
        %1173 = vmatprep.subr.bf16.mxu0 0
        %1174 = vmatpush2.bf16.msra.mxu0 0
        %1175 = vmatprep.subr.bf16.mxu0 0
        %1176 = vmatpush2.bf16.msra.mxu0 0
        %1177 = vmatprep.subr.bf16.mxu0 0
        %1178 = vmatpush2.bf16.msra.mxu0 0
        %1179 = vmatprep.mubr.bf16.mxu0 0
        %1180 = vmatmul.mubr.bf16.gmra.mxu0 %v1142
        %v1181 = vpop.f32.mrf.mxu0
        %v1182 = vadd.f32 0.0, %v1181
        %v1183 = vpop.f32.mrf.mxu0
        %v1184 = vpop.f32.mrf.mxu0
        %v1185 = vpop.f32.mrf.mxu0
        %1186 = vdwg.mxu0
        %v1188 = vsel %vm1113, %v1137, 0
        %v1190 = vsel %vm1144, %v1015, 0
        %1192 = vmatprep.subr.bf16.mxu0 0
        %1193 = vmatpush1.bf16.msra.mxu0 0
        %1194 = vmatprep.subr.bf16.mxu0 0
        %1195 = vmatpush1.bf16.msra.mxu0 0
        %1196 = vmatprep.subr.bf16.mxu0 0
        %1197 = vmatpush1.bf16.msra.mxu0 0
        %1198 = vmatprep.subr.bf16.mxu0 0
        %1199 = vmatpush1.bf16.msra.mxu0 0
        %1200 = vmatprep.subr.bf16.mxu0 0
        %1201 = vmatpush1.bf16.msra.mxu0 0
        %1202 = vmatprep.subr.bf16.mxu0 0
        %1203 = vmatpush1.bf16.msra.mxu0 0
        %1204 = vmatprep.subr.bf16.mxu0 0
        %1205 = vmatpush1.bf16.msra.mxu0 0
        %1206 = vmatprep.subr.bf16.mxu0 0
        %1207 = vmatpush1.bf16.msra.mxu0 %v1190
        %1208 = vmatprep.subr.bf16.mxu0 0
        %1209 = vmatpush2.bf16.msra.mxu0 0
        %1210 = vmatprep.subr.bf16.mxu0 0
        %1211 = vmatpush2.bf16.msra.mxu0 0
        %1212 = vmatprep.subr.bf16.mxu0 0
        %1213 = vmatpush2.bf16.msra.mxu0 0
        %1214 = vmatprep.subr.bf16.mxu0 0
        %1215 = vmatpush2.bf16.msra.mxu0 0
        %1216 = vmatprep.subr.bf16.mxu0 0
        %1217 = vmatpush2.bf16.msra.mxu0 0
        %1218 = vmatprep.subr.bf16.mxu0 0
        %1219 = vmatpush2.bf16.msra.mxu0 0
        %1220 = vmatprep.subr.bf16.mxu0 0
        %1221 = vmatpush2.bf16.msra.mxu0 0
        %1222 = vmatprep.subr.bf16.mxu0 0
        %1223 = vmatpush2.bf16.msra.mxu0 0
        %1224 = vmatprep.mubr.bf16.mxu0 0
        %1225 = vmatmul.mubr.bf16.gmra.mxu0 %v1188
        %v1226 = vpop.f32.mrf.mxu0
        %v1227 = vadd.f32 0.0, %v1226
        %v1228 = vpop.f32.mrf.mxu0
        %v1229 = vpop.f32.mrf.mxu0
        %v1230 = vpop.f32.mrf.mxu0
        %1231 = vdwg.mxu0
        %v1232 = vcombine.high %v1182, 0.0
        %v1234 = vunpack.c.l.s4 1983009808
        %v1235 = vunpack.c.0.s8 %v1234
        %v1236 = vlaneseq
        %v1237 = vshrl.u32 %v1236, 7
        %v1238 = vsub.s32 %v1235, %v1237
        %v1239 = vrot.slane %v1182, %v1238
        %v1241 = vunpack.c.l.s4 1983009808
        %v1242 = vunpack.c.0.s8 %v1241
        %v1243 = vlaneseq
        %v1244 = vshrl.u32 %v1243, 7
        %v1245 = vsub.s32 %v1242, %v1244
        %v1246 = vrot.slane %v1232, %v1245
        %v1247 = vcombine.high %v1227, 0.0
        %v1249 = vunpack.c.l.s4 1983009808
        %v1250 = vunpack.c.0.s8 %v1249
        %v1251 = vlaneseq
        %v1252 = vshrl.u32 %v1251, 7
        %v1253 = vsub.s32 %v1250, %v1252
        %v1254 = vrot.slane %v1227, %v1253
        %v1256 = vunpack.c.l.s4 1983009808
        %v1257 = vunpack.c.0.s8 %v1256
        %v1258 = vlaneseq
        %v1259 = vshrl.u32 %v1258, 7
        %v1260 = vsub.s32 %v1257, %v1259
        %v1261 = vrot.slane %v1247, %v1260
        %v1262 = vcombine.low %v1239, %v1254
        %v1263 = vcombine.high %v1239, %v1254
        %v1265 = vunpack.c.l.s4 1934713408
        %v1266 = vunpack.c.0.s8 %v1265
        %v1267 = vlaneseq
        %v1268 = vshrl.u32 %v1267, 7
        %v1269 = vsub.s32 %v1266, %v1268
        %v1270 = vrot.slane %v1262, %v1269
        %v1272 = vunpack.c.l.s4 1934713408
        %v1273 = vunpack.c.0.s8 %v1272
        %v1274 = vlaneseq
        %v1275 = vshrl.u32 %v1274, 7
        %v1276 = vsub.s32 %v1273, %v1275
        %v1277 = vrot.slane %v1263, %v1276
        %v1278 = vcombine.low %v1246, %v1261
        %v1279 = vcombine.high %v1246, %v1261
        %v1281 = vunpack.c.l.s4 1934713408
        %v1282 = vunpack.c.0.s8 %v1281
        %v1283 = vlaneseq
        %v1284 = vshrl.u32 %v1283, 7
        %v1285 = vsub.s32 %v1282, %v1284
        %v1286 = vrot.slane %v1278, %v1285
        %v1288 = vunpack.c.l.s4 1934713408
        %v1289 = vunpack.c.0.s8 %v1288
        %v1290 = vlaneseq
        %v1291 = vshrl.u32 %v1290, 7
        %v1292 = vsub.s32 %v1289, %v1291
        %v1293 = vrot.slane %v1279, %v1292
        %v1294 = vcombine.high %v1270, 0.0
        %v1295 = vcombine.high %v1277, 0.0
        %v1296 = vcombine.high %v1286, 0.0
        %v1297 = vcombine.high %v1293, 0.0
        %v1298 = vcombine.low %v1270, %v1277
        %v1300 = vunpack.c.l.s4 1983009808
        %v1301 = vunpack.c.0.s8 %v1300
        %v1302 = vlaneseq
        %v1303 = vshrl.u32 %v1302, 7
        %v1304 = vsub.s32 %v1301, %v1303
        %v1305 = vrot.slane %v1298, %v1304
        %v1306 = vcombine.low %v1294, %v1295
        %v1308 = vunpack.c.l.s4 1983009808
        %v1309 = vunpack.c.0.s8 %v1308
        %v1310 = vlaneseq
        %v1311 = vshrl.u32 %v1310, 7
        %v1312 = vsub.s32 %v1309, %v1311
        %v1313 = vrot.slane %v1306, %v1312
        %v1314 = vcombine.low %v1286, %v1293
        %v1316 = vunpack.c.l.s4 1983009808
        %v1317 = vunpack.c.0.s8 %v1316
        %v1318 = vlaneseq
        %v1319 = vshrl.u32 %v1318, 7
        %v1320 = vsub.s32 %v1317, %v1319
        %v1321 = vrot.slane %v1314, %v1320
        %v1322 = vcombine.low %v1296, %v1297
        %v1324 = vunpack.c.l.s4 1983009808
        %v1325 = vunpack.c.0.s8 %v1324
        %v1326 = vlaneseq
        %v1327 = vshrl.u32 %v1326, 7
        %v1328 = vsub.s32 %v1325, %v1327
        %v1329 = vrot.slane %v1322, %v1328
        %v1330 = vcombine.low %v1305, %v1313
        %v1332 = vunpack.c.l.s4 1934713408
        %v1333 = vunpack.c.0.s8 %v1332
        %v1334 = vlaneseq
        %v1335 = vshrl.u32 %v1334, 7
        %v1336 = vsub.s32 %v1333, %v1335
        %v1337 = vrot.slane %v1330, %v1336
        %v1338 = vcombine.low %v1321, %v1329
        %v1340 = vunpack.c.l.s4 1934713408
        %v1341 = vunpack.c.0.s8 %v1340
        %v1342 = vlaneseq
        %v1343 = vshrl.u32 %v1342, 7
        %v1344 = vsub.s32 %v1341, %v1343
        %v1345 = vrot.slane %v1338, %v1344
        %v1346 = vcombine.low %v1337, %v1345
        %v1347 = vcombine.high %v1337, %v1345
        %1349 = vrot.lane.b32.xlu0 %v1347, 16
        %v1350 = vpop.permute.xlu0 %1349
        %v1352 = vsel %vm1020, %v1346, %v1350
        %v1353 = vpack.c.bf16 %v1352, %v1352
        %v1354 = vld [vmem:[%s8] sm:$0xf]
        %v1355 = vld [vmem:[%s8 + $0x4] sm:$0xf]
        %v1356 = vld [vmem:[%s8 + $0x8] sm:$0xf]
        %v1357 = vld [vmem:[%s8 + $0xc] sm:$0xf]
        %v1358 = vld [vmem:[%s9] sm:$0x1]
        %v1360 = vlaneseq
        %v1361 = vshrl.u32 %v1360, 7
        %v1362 = vsub.s32 0, %v1361
        %v1363 = vrot.slane %v1358, %v1362
        %v1369 = vunpack.c.l.b16 %v1354
        %v1370 = vunpack.c.l.b16 %v1355
        %v1371 = vunpack.c.l.b16 %v1356
        %v1372 = vunpack.c.l.b16 %v1357
        %v1373 = vpack.c.b16 %v1370, %v1369
        %v1374 = vpack.c.b16 %v1372, %v1371
        %v1378 = vsel %vm661, %v1353, 0
        %1380 = vmatprep.subr.bf16.mxu0 0
        %1381 = vmatpush1.bf16.msra.mxu0 0
        %1382 = vmatprep.subr.bf16.mxu0 0
        %1383 = vmatpush1.bf16.msra.mxu0 0
        %1384 = vmatprep.subr.bf16.mxu0 0
        %1385 = vmatpush1.bf16.msra.mxu0 0
        %1386 = vmatprep.subr.bf16.mxu0 0
        %1387 = vmatpush1.bf16.msra.mxu0 0
        %1388 = vmatprep.subr.bf16.mxu0 0
        %1389 = vmatpush1.bf16.msra.mxu0 0
        %1390 = vmatprep.subr.bf16.mxu0 0
        %1391 = vmatpush1.bf16.msra.mxu0 0
        %1392 = vmatprep.subr.bf16.mxu0 0
        %1393 = vmatpush1.bf16.msra.mxu0 %v1374
        %1394 = vmatprep.subr.bf16.mxu0 0
        %1395 = vmatpush1.bf16.msra.mxu0 %v1373
        %1396 = vmatprep.subr.bf16.mxu0 0
        %1397 = vmatpush2.bf16.msra.mxu0 0
        %1398 = vmatprep.subr.bf16.mxu0 0
        %1399 = vmatpush2.bf16.msra.mxu0 0
        %1400 = vmatprep.subr.bf16.mxu0 0
        %1401 = vmatpush2.bf16.msra.mxu0 0
        %1402 = vmatprep.subr.bf16.mxu0 0
        %1403 = vmatpush2.bf16.msra.mxu0 0
        %1404 = vmatprep.subr.bf16.mxu0 0
        %1405 = vmatpush2.bf16.msra.mxu0 0
        %1406 = vmatprep.subr.bf16.mxu0 0
        %1407 = vmatpush2.bf16.msra.mxu0 0
        %1408 = vmatprep.subr.bf16.mxu0 0
        %1409 = vmatpush2.bf16.msra.mxu0 0
        %1410 = vmatprep.subr.bf16.mxu0 0
        %1411 = vmatpush2.bf16.msra.mxu0 0
        %1412 = vmatprep.mubr.bf16.mxu0 0
        %1413 = vmatmul.mubr.bf16.gmra.mxu0 %v1378
        %v1414 = vpop.f32.mrf.mxu0
        %v1415 = vadd.f32 %v1363, %v1414
        %v1416 = vpop.f32.mrf.mxu0
        %v1417 = vpop.f32.mrf.mxu0
        %v1418 = vpop.f32.mrf.mxu0
        %1419 = vdwg.mxu0
        %v1420 = vadd.f32 %v1415, %v634
        %v1421 = vsel %vm661, %v1420, 0.0
        %1422 = vadd.xlane.f32.xlu0 %v1421
        %v1423 = vpop.xlane.xlu0 %1422
        %v1424 = vrcp.pop 32.0
        %v1425 = vmul.f32 %v1423, %v1424
        %v1426 = vsub.f32 %v1420, %v1425
        %v1427 = vmul.f32 %v1426, %v1426
        %v1428 = vsel %vm661, %v1427, 0.0
        %1429 = vadd.xlane.f32.xlu0 %v1428
        %v1430 = vpop.xlane.xlu0 %1429
        %v1431 = vmul.f32 %v1430, %v1424
        %v1432 = vadd.f32 %v1431, 1e-05
        %v1433 = vrsqrt.pop %v1432
        %v1434 = vmul.f32 %v1426, %v1433
        %v1435 = vld [vmem:[%s10] sm:$0x1]
        %v1437 = vlaneseq
        %v1438 = vshrl.u32 %v1437, 7
        %v1439 = vsub.s32 0, %v1438
        %v1440 = vrot.slane %v1435, %v1439
        %v1442 = vmul.f32 %v1434, %v1440
        %v1443 = vld [vmem:[%s11] sm:$0x1]
        %v1445 = vlaneseq
        %v1446 = vshrl.u32 %v1445, 7
        %v1447 = vsub.s32 0, %v1446
        %v1448 = vrot.slane %v1443, %v1447
        %v1450 = vadd.f32 %v1442, %v1448
        %v1451 = vld [vmem:[%s632] sm:$0xff]
        %1453 = vset.pattern.permute.xlu0 0
        %1454 = vperm.xlu0 %1453, %v1451
        %v1455 = vpop.permute.xlu0 %1454
        %v1457 = vmul.f32 %v1450, %v1455
        %v1458 = vpack.c.bf16 %v1457, %v1457
        %vm1459 = vcmask 257024
        %1460 = vst.msk [vmem:[%s611] sm:$0xf] %vm1459, %v1458
        %s1461 = sand.u32 %s339, 1
        %s1462 = scalar_lea.sflag [#allocation4], %s1461
        %s1463 = sand.u32 %s339, 1
        %s1464 = smul.addr %s1463, 4
        %s1465 = scalar_lea.vmem [#allocation13], %s1464
        %s1466 = sand.u32 %s367, 1
        %s1467 = scalar_lea.sflag [#allocation15], %s1466
        %s1468 = sand.u32 %s367, 1
        %s1469 = smul.addr %s1468, 8
        %s1470 = scalar_lea.vmem [#allocation14], %s1469
        // Predicated region
        $region93: #{tpu_custom_call.1} parent=67 // pred_check
          %p1471 = pneg %p349
        $region94: #{tpu_custom_call.1} parent=67 // pred_check_branch
          %1473 = sbr.rel (%p1471) target = $region96
        $region95: #{tpu_custom_call.1} parent=67 // pred_region
          %s1475 = ssub.s32 64, 64
          %1476 = vsyncadd %s1462, %s1475
          %s1477 = sadd.s32 %s44, %s43
          %s1478 = smul.addr %s1477, 64
          %s1479 = scalar_lea.hbm %s12, %s1478
          %s1481 = sshll.u32 %s1465, 4
          %s1482 = int_to_ptr.vmem [resolvable:$true] %s1481
          %1484 = dma.vmem_to_hbm [thread:$0]  %s1482, 64, %s1479, %s1462
        $region96: #{tpu_custom_call.1} parent=67 // pred_fallthru
          _
        // Predicated region
        $region97: #{tpu_custom_call.1} parent=67 // pred_check
          %p1485 = pneg %p377
        $region98: #{tpu_custom_call.1} parent=67 // pred_check_branch
          %1487 = sbr.rel (%p1485) target = $region100
        $region99: #{tpu_custom_call.1} parent=67 // pred_region
          %s1489 = ssub.s32 128, 128
          %1490 = vsyncadd %s1467, %s1489
          %s1491 = sadd.s32 %s44, %s43
          %s1492 = smul.addr %s1491, 64
          %s1493 = scalar_lea.hbm %s13, %s1492
          %s1494 = sshll.u32 %s1470, 4
          %s1495 = int_to_ptr.vmem [resolvable:$true] %s1494
          %1500 = dma.vmem_to_hbm [thread:$0]  %s1495, 128, %s1493, %s1467, 64, 128, 4
        $region100: #{tpu_custom_call.1} parent=67 // pred_fallthru
          _
      $region68: #{tpu_custom_call.1} parent=5 // pred_fallthru
        _
      %p1501 = scmp.le.s32.totalorder 2, %s34
      // Predicated region
      $region101: #{tpu_custom_call.1} parent=5 // pred_check
        %p1502 = pneg %p1501
      $region102: #{tpu_custom_call.1} parent=5 // pred_check_branch
        %1504 = sbr.rel (%p1502) target = $region104
      $region103: #{tpu_custom_call.1} parent=5 // pred_region
        %s1505 = ssub.s32 %s34, 2
        // Predicated region
        $region105: #{tpu_custom_call.1} parent=103 // pred_check
          %p1506 = pneg %p355
        $region106: #{tpu_custom_call.1} parent=103 // pred_check_branch
          %1508 = sbr.rel (%p1506) target = $region108
        $region107: #{tpu_custom_call.1} parent=103 // pred_region
          %s1509 = sand.u32 %s340, 1
          %s1510 = scalar_lea.sflag [#allocation4], %s1509
          %s1511 = sand.u32 %s340, 1
          %s1512 = smul.addr %s1511, 4
          %s1513 = scalar_lea.vmem [#allocation13], %s1512
          %1514 = dma.done %s1510, 64
        $region108: #{tpu_custom_call.1} parent=103 // pred_fallthru
          _
        // Predicated region
        $region109: #{tpu_custom_call.1} parent=103 // pred_check
          %p1515 = pneg %p383
        $region110: #{tpu_custom_call.1} parent=103 // pred_check_branch
          %1517 = sbr.rel (%p1515) target = $region112
        $region111: #{tpu_custom_call.1} parent=103 // pred_region
          %s1518 = sand.u32 %s368, 1
          %s1519 = scalar_lea.sflag [#allocation15], %s1518
          %s1520 = sand.u32 %s368, 1
          %s1521 = smul.addr %s1520, 8
          %s1522 = scalar_lea.vmem [#allocation14], %s1521
          %1523 = dma.done %s1519, 128
        $region112: #{tpu_custom_call.1} parent=103 // pred_fallthru
          _
      $region104: #{tpu_custom_call.1} parent=5 // pred_fallthru
        _
    $region6: #{tpu_custom_call.1} parent=1 // loop_footer
      %s38 = sadd.s32 1, %s34
    $region7: #{tpu_custom_call.1} parent=1 // loop_footer_branch
      %33 = sbr.rel target = $region3
    $region8: #{tpu_custom_call.1} parent=1 // loop_exit
      _
    %1524 = vsyncpa [#allocation3], 1
    %s1525 = scalar_lea.sflag [#allocation3], 1
    %1526 = vsyncpa %s1525, 1
    %1527 = vsyncpa [#allocation6], 1
    %s1528 = scalar_lea.sflag [#allocation6], 1
    %1529 = vsyncpa %s1528, 1
    %1530 = vsyncpa [#allocation9], 1
    %1531 = vsyncpa [#allocation12], 1
    %1532 = vsyncpa [#allocation4], 1
    %s1533 = scalar_lea.sflag [#allocation4], 1
    %1534 = vsyncpa %s1533, 1
    %1535 = vsyncpa [#allocation15], 1
    %s1536 = scalar_lea.sflag [#allocation15], 1
    %1537 = vsyncpa %s1536, 1

</llo_original>
